<compile_context>
chip_gen: v5e
topology: v5e:2x2
jax: 0.10.0
libtpu: 0.0.40
codegen_flags: <defaults>
</compile_context>

<pallas_src>
import functools

import numpy as np
import jax
import jax.numpy as jnp
from jax.experimental import pallas as pl
from jax.experimental.pallas import tpu as pltpu

GAMMA = 10.0


@functools.lru_cache(maxsize=None)
def _bilinear_weight_matrix(out_size: int, in_size: int) -> np.ndarray:
    """1-D weights matching F.interpolate(mode='bilinear', align_corners=False)."""
    w = np.zeros((out_size, in_size), dtype=np.float32)
    scale = in_size / out_size
    for i in range(out_size):
        src = (i + 0.5) * scale - 0.5
        src = max(src, 0.0)                       # PyTorch clamps negative src to 0
        i0 = min(int(np.floor(src)), in_size - 1)
        i1 = min(i0 + 1, in_size - 1)
        l1 = src - i0
        w[i, i0] += 1.0 - l1
        w[i, i1] += l1
    return w


def _loss_kernel(preds_ref, gts_ref, hm_ref, mask_ref, wy_ref, wxt_ref, out_ref,
                 *, gamma, hm_count):
    """One grid step = TN batch elements -> one (1, 8, 128) partial tile."""
    # ---- separable bilinear footprint (binarized): tap counts per (h, w) ----
    m = mask_ref[...]                                             # (TN, Hm, Wm) bf16 {0,1}
    tn, hm_sz, wm_sz = m.shape
    h_sz = wy_ref.shape[0]
    w_sz = wxt_ref.shape[1]

    wy_b = jnp.broadcast_to(wy_ref[...][None], (tn, h_sz, hm_sz))    # (TN, H, Hm)
    wxt_b = jnp.broadcast_to(wxt_ref[...][None], (tn, wm_sz, w_sz))  # (TN, Wm, W)

    t = jnp.einsum('nha,nab->nhb', wy_b, m,
                   preferred_element_type=jnp.float32)            # (TN, H, Wm)
    r = jnp.einsum('nhb,nbw->nhw', t.astype(jnp.bfloat16), wxt_b,
                   preferred_element_type=jnp.float32)            # (TN, H, W) tap counts
    ind = (r == 0.0).astype(jnp.float32)                          # == (small_mask == 0)

    # ---- sigmoid(heatmaps), channel-sum, masked spatial reduce ----
    # TODO(synk): cast to bf16 before the sigmoid on v6e/v7x (bf16 EUP, ~2x);
    # kept f32 so results match the f32 reference on every TPU generation.
    sig = jax.nn.sigmoid(hm_ref[...].astype(jnp.float32))         # (TN, C, H, W)
    s = jnp.sum(sig, axis=1)                                      # (TN, H, W)
    partial = jnp.sum(s * ind)                                    # scalar for this block
    hm_term = partial * (gamma / hm_count)

    sub = jax.lax.broadcasted_iota(jnp.int32, (8, 128), 0)
    lane = jax.lax.broadcasted_iota(jnp.int32, (8, 128), 1)
    corner = (sub == 0) & (lane == 0)
    out_ref[0] = jnp.where(corner, hm_term, 0.0)

    # ---- BCEWithLogits (mean), added once by block 0 (parallel-safe) ----
    @pl.when(pl.program_id(0) == 0)
    def _():
        x = preds_ref[...].astype(jnp.float32)
        y = gts_ref[...].astype(jnp.float32)
        # numerically stable: max(x,0) - x*y + log(1 + exp(-|x|))
        bce = jnp.maximum(x, 0.0) - x * y + jnp.log1p(jnp.exp(-jnp.abs(x)))
        cls = jnp.sum(bce) * (1.0 / float(x.size))
        out_ref[0] = out_ref[0] + jnp.where(corner, cls, 0.0)


def final_classification_with_hm_loss(class_label_preds, class_label_gts,
                                      heatmaps, mask, gamma=GAMMA, block_n=8):
    N, C, H, W = heatmaps.shape
    Nm, Cm, Hm, Wm = mask.shape
    assert Nm == N and Cm == 1, "mask expected to have a single channel"
    B, K = class_label_preds.shape

    # --- wrapper-side layout glue ---
    # Binarized {0,1} bf16 mask: the "== 0" indicator only cares about which
    # taps are nonzero, so this is exact, halves mask DMA, and keeps the MXU on
    # its bf16 path on every chip (no int8 needed, works on v7x too).
    mask_bin = (mask.reshape(N, Hm, Wm) != 0).astype(jnp.bfloat16)
    hm = heatmaps

    num_blocks = pl.cdiv(N, block_n)
    n_pad = num_blocks * block_n - N
    if n_pad:
        # Padded rows: all-ones mask -> indicator 0 -> zero contribution.
        hm = jnp.pad(hm, ((0, n_pad), (0, 0), (0, 0), (0, 0)))
        mask_bin = jnp.pad(mask_bin, ((0, n_pad), (0, 0), (0, 0)),
                           constant_values=1)

    wy = _bilinear_weight_matrix(H, Hm)                        # (H, Hm) torch-equivalent
    wx = _bilinear_weight_matrix(W, Wm)                        # (W, Wm)
    wy_ind = jnp.asarray(wy > 0.0, dtype=jnp.bfloat16)         # (H, Hm) {0,1}
    wxt_ind = jnp.asarray((wx > 0.0).T, dtype=jnp.bfloat16)    # (Wm, W) {0,1}

    kernel = functools.partial(_loss_kernel, gamma=float(gamma),
                               hm_count=float(N * C * H * W))

    partials = pl.pallas_call(
        kernel,
        out_shape=jax.ShapeDtypeStruct((num_blocks, 8, 128), jnp.float32),
        grid=(num_blocks,),
        in_specs=[
            pl.BlockSpec((B, K), lambda b: (0, 0)),                   # preds (resident)
            pl.BlockSpec((B, K), lambda b: (0, 0)),                   # gts   (resident)
            pl.BlockSpec((block_n, C, H, W), lambda b: (b, 0, 0, 0)), # heatmap block
            pl.BlockSpec((block_n, Hm, Wm), lambda b: (b, 0, 0)),     # mask block
            pl.BlockSpec((H, Hm), lambda b: (0, 0)),                  # wy indicator (resident)
            pl.BlockSpec((Wm, W), lambda b: (0, 0)),                  # wx.T indicator (resident)
        ],
        out_specs=pl.BlockSpec((1, 8, 128), lambda b: (b, 0, 0)),
        compiler_params=pltpu.CompilerParams(
            dimension_semantics=("parallel",)),   # per-block partials -> megacore-safe
    )(class_label_preds, class_label_gts, hm, mask_bin, wy_ind, wxt_ind)

    # Only lane/sublane (0, 0) of each per-block tile is nonzero.
    return jnp.sum(partials)


def _reference(class_label_preds, class_label_gts, heatmaps, mask, gamma=GAMMA):
    """Pure-JAX reference using the same (torch-equivalent) interpolation."""
    N, C, H, W = heatmaps.shape
    _, _, Hm, Wm = mask.shape
    wy = jnp.asarray(_bilinear_weight_matrix(H, Hm))
    wx = jnp.asarray(_bilinear_weight_matrix(W, Wm))
    x = class_label_preds.astype(jnp.float32)
    y = class_label_gts.astype(jnp.float32)
    bce = jnp.maximum(x, 0.0) - x * y + jnp.log1p(jnp.exp(-jnp.abs(x)))
    cls_loss = jnp.mean(bce)
    small = jnp.einsum('ha,nab,wb->nhw', wy, mask[:, 0].astype(jnp.float32), wx)
    ind = (small == 0.0).astype(jnp.float32)[:, None, :, :]
    hm_loss = jnp.mean(jax.nn.sigmoid(heatmaps.astype(jnp.float32)) * ind)
    return cls_loss + gamma * hm_loss


if __name__ == "__main__":
    key = jax.random.PRNGKey(0)
    k1, k2, k3, k4 = jax.random.split(key, 4)

    N, C, H, W = 16, 4, 16, 16      # heatmaps
    Hm, Wm = 32, 32                 # full-resolution mask
    B, K = 16, 4                    # classification logits

    class_label_preds = jax.random.normal(k1, (B, K), dtype=jnp.float32)
    class_label_gts = (jax.random.uniform(k2, (B, K)) > 0.5).astype(jnp.float32)
    heatmaps = jax.random.normal(k3, (N, C, H, W), dtype=jnp.float32)
    mask = (jax.random.uniform(k4, (N, 1, Hm, Wm)) > 0.6).astype(jnp.float32)

    loss = final_classification_with_hm_loss(
        class_label_preds, class_label_gts, heatmaps, mask)
    loss = jax.block_until_ready(loss)

    ref = _reference(class_label_preds, class_label_gts, heatmaps, mask)
    assert jnp.allclose(loss, ref, rtol=1e-5, atol=5e-5), (loss, ref)

    print("KERNEL_OK")
</pallas_src>

<mosaic_0001>
module attributes {stable_mosaic.version = 11 : i64} {
  func.func @_loss_kernel(%arg0: i32, %arg1: memref<16x4xf32, #tpu.memory_space<vmem>>, %arg2: memref<16x4xf32, #tpu.memory_space<vmem>>, %arg3: memref<8x4x16x16xf32, #tpu.memory_space<vmem>>, %arg4: memref<8x32x32xbf16, #tpu.memory_space<vmem>>, %arg5: memref<16x32xbf16, #tpu.memory_space<vmem>>, %arg6: memref<32x16xbf16, #tpu.memory_space<vmem>>, %arg7: memref<1x8x128xf32, #tpu.memory_space<vmem>>) attributes {dimension_semantics = [#tpu.dimension_semantics<parallel>], iteration_bounds = array<i64: 2>, scalar_prefetch = 0 : i64, scratch_operands = 0 : i64, tpu.core_type = #tpu.core_type<tc>, window_params = [{pipeline_mode = #tpu.pipeline_mode<synchronous>, transform_indices = @transform_0, window_bounds = array<i64: 16, 4>}, {pipeline_mode = #tpu.pipeline_mode<synchronous>, transform_indices = @transform_1, window_bounds = array<i64: 16, 4>}, {transform_indices = @transform_2, window_bounds = array<i64: 8, 4, 16, 16>}, {transform_indices = @transform_3, window_bounds = array<i64: 8, 32, 32>}, {pipeline_mode = #tpu.pipeline_mode<synchronous>, transform_indices = @transform_4, window_bounds = array<i64: 16, 32>}, {pipeline_mode = #tpu.pipeline_mode<synchronous>, transform_indices = @transform_5, window_bounds = array<i64: 32, 16>}, {transform_indices = @transform_6, window_bounds = array<i64: 1, 8, 128>}]} {
    %c0 = arith.constant 0 : index
    %c0_0 = arith.constant 0 : index
    %c0_1 = arith.constant 0 : index
    %0 = vector.load %arg4[%c0, %c0_0, %c0_1] : memref<8x32x32xbf16, #tpu.memory_space<vmem>>, vector<8x32x32xbf16>
    %c0_2 = arith.constant 0 : index
    %c0_3 = arith.constant 0 : index
    %1 = vector.load %arg5[%c0_2, %c0_3] : memref<16x32xbf16, #tpu.memory_space<vmem>>, vector<16x32xbf16>
    %2 = vector.shape_cast %1 : vector<16x32xbf16> to vector<1x16x32xbf16>
    %3 = vector.shape_cast %2 : vector<1x16x32xbf16> to vector<1x16x32xbf16>
    %4 = vector.broadcast %3 : vector<1x16x32xbf16> to vector<8x16x32xbf16>
    %c0_4 = arith.constant 0 : index
    %c0_5 = arith.constant 0 : index
    %5 = vector.load %arg6[%c0_4, %c0_5] : memref<32x16xbf16, #tpu.memory_space<vmem>>, vector<32x16xbf16>
    %6 = vector.shape_cast %5 : vector<32x16xbf16> to vector<1x32x16xbf16>
    %7 = vector.shape_cast %6 : vector<1x32x16xbf16> to vector<1x32x16xbf16>
    %8 = vector.broadcast %7 : vector<1x32x16xbf16> to vector<8x32x16xbf16>
    "tpu.trace_start"() <{level = 10 : i32, message = "nha,nab->nhb"}> : () -> ()
    %cst = arith.constant dense<0.000000e+00> : vector<8x16x32xf32>
    %9 = tpu.matmul %4, %0, %cst {dimension_numbers = #tpu.dot_dimension_numbers<[2], [1], [1], [2], [0, 0, 0, 1, 1, 2], [0], [0]>} : vector<8x16x32xbf16>, vector<8x32x32xbf16>, vector<8x16x32xf32> -> vector<8x16x32xf32>
    "tpu.trace_stop"() : () -> ()
    %10 = arith.truncf %9 : vector<8x16x32xf32> to vector<8x16x32xbf16>
    "tpu.trace_start"() <{level = 10 : i32, message = "nhb,nbw->nhw"}> : () -> ()
    %cst_6 = arith.constant dense<0.000000e+00> : vector<8x16x16xf32>
    %11 = tpu.matmul %10, %8, %cst_6 {dimension_numbers = #tpu.dot_dimension_numbers<[2], [1], [1], [2], [0, 0, 0, 1, 1, 2], [0], [0]>} : vector<8x16x32xbf16>, vector<8x32x16xbf16>, vector<8x16x16xf32> -> vector<8x16x16xf32>
    %cst_7 = arith.constant 0.000000e+00 : f32
    "tpu.trace_stop"() : () -> ()
    %12 = vector.broadcast %cst_7 : f32 to vector<8x16x16xf32>
    %13 = arith.cmpf oeq, %11, %12 : vector<8x16x16xf32>
    %14 = arith.extui %13 : vector<8x16x16xi1> to vector<8x16x16xi32>
    %15 = arith.sitofp %14 : vector<8x16x16xi32> to vector<8x16x16xf32>
    %c0_8 = arith.constant 0 : index
    %c0_9 = arith.constant 0 : index
    %c0_10 = arith.constant 0 : index
    %c0_11 = arith.constant 0 : index
    %16 = vector.load %arg3[%c0_8, %c0_9, %c0_10, %c0_11] : memref<8x4x16x16xf32, #tpu.memory_space<vmem>>, vector<8x4x16x16xf32>
    %17 = arith.negf %16 : vector<8x4x16x16xf32>
    %18 = math.exp %17 : vector<8x4x16x16xf32>
    %cst_12 = arith.constant 1.000000e+00 : f32
    %19 = vector.broadcast %cst_12 : f32 to vector<8x4x16x16xf32>
    %20 = arith.addf %19, %18 : vector<8x4x16x16xf32>
    %21 = arith.divf %19, %20 : vector<8x4x16x16xf32>
    %cst_13 = arith.constant dense<0.000000e+00> : vector<8x16x16xf32>
    %22 = vector.multi_reduction <add>, %21, %cst_13 [1] : vector<8x4x16x16xf32> to vector<8x16x16xf32>
    %23 = arith.mulf %22, %15 : vector<8x16x16xf32>
    %24 = vector.shape_cast %23 : vector<8x16x16xf32> to vector<1x8x16x16xf32>
    %cst_14 = arith.constant dense<0.000000e+00> : vector<1xf32>
    %25 = vector.multi_reduction <add>, %24, %cst_14 [1, 2, 3] : vector<1x8x16x16xf32> to vector<1xf32>
    %26 = vector.shape_cast %25 : vector<1xf32> to vector<1x1x1x1xf32>
    %27 = vector.extract %26[0, 0, 0, 0] : f32 from vector<1x1x1x1xf32>
    %cst_15 = arith.constant 6.10351563E-4 : f32
    %28 = arith.mulf %27, %cst_15 : f32
    %29 = tpu.iota {dimensions = array<i32: 0>} : vector<8x128xi32>
    %30 = tpu.iota {dimensions = array<i32: 1>} : vector<8x128xi32>
    %c0_i32 = arith.constant 0 : i32
    %31 = vector.broadcast %c0_i32 : i32 to vector<8x128xi32>
    %32 = arith.cmpi eq, %29, %31 : vector<8x128xi32>
    %c0_i32_16 = arith.constant 0 : i32
    %33 = vector.broadcast %c0_i32_16 : i32 to vector<8x128xi32>
    %34 = arith.cmpi eq, %30, %33 : vector<8x128xi32>
    %35 = arith.andi %32, %34 : vector<8x128xi1>
    %cst_17 = arith.constant 0.000000e+00 : f32
    %36 = vector.broadcast %28 : f32 to vector<8x128xf32>
    %37 = vector.broadcast %cst_17 : f32 to vector<8x128xf32>
    %38 = arith.select %35, %36, %37 : vector<8x128xi1>, vector<8x128xf32>
    %c0_18 = arith.constant 0 : index
    %c0_19 = arith.constant 0 : index
    %c0_20 = arith.constant 0 : index
    %39 = vector.load %arg7[%c0_18, %c0_19, %c0_20] : memref<1x8x128xf32, #tpu.memory_space<vmem>>, vector<1x8x128xf32>
    %40 = vector.shape_cast %39 : vector<1x8x128xf32> to vector<8x128xf32>
    %41 = vector.shape_cast %38 : vector<8x128xf32> to vector<1x8x128xf32>
    tpu.vector_store %arg7[%c0_18, %c0_19, %c0_20], %41 {strides = array<i32>} : memref<1x8x128xf32, #tpu.memory_space<vmem>>, vector<1x8x128xf32>,
    %c0_i32_21 = arith.constant 0 : i32
    %42 = arith.cmpi eq, %arg0, %c0_i32_21 : i32
    %43 = arith.extui %42 : i1 to i32
    %c0_i32_22 = arith.constant 0 : i32
    %44 = arith.cmpi ne, %43, %c0_i32_22 : i32
    scf.if %44 {
      %c0_23 = arith.constant 0 : index
      %c0_24 = arith.constant 0 : index
      %45 = vector.load %arg1[%c0_23, %c0_24] : memref<16x4xf32, #tpu.memory_space<vmem>>, vector<16x4xf32>
      %c0_25 = arith.constant 0 : index
      %c0_26 = arith.constant 0 : index
      %46 = vector.load %arg2[%c0_25, %c0_26] : memref<16x4xf32, #tpu.memory_space<vmem>>, vector<16x4xf32>
      %cst_27 = arith.constant 0.000000e+00 : f32
      %47 = vector.broadcast %cst_27 : f32 to vector<16x4xf32>
      %48 = arith.maximumf %45, %47 : vector<16x4xf32>
      %49 = arith.mulf %45, %46 : vector<16x4xf32>
      %50 = arith.subf %48, %49 : vector<16x4xf32>
      %51 = math.absf %45 : vector<16x4xf32>
      %cst_28 = arith.constant 0.000000e+00 : f32
      %52 = vector.broadcast %cst_28 : f32 to vector<16x4xf32>
      %53 = arith.subf %52, %51 : vector<16x4xf32>
      %54 = math.exp %53 : vector<16x4xf32>
      %55 = math.log1p %54 : vector<16x4xf32>
      %56 = arith.addf %50, %55 : vector<16x4xf32>
      %57 = vector.shape_cast %56 : vector<16x4xf32> to vector<1x16x4xf32>
      %cst_29 = arith.constant dense<0.000000e+00> : vector<1xf32>
      %58 = vector.multi_reduction <add>, %57, %cst_29 [1, 2] : vector<1x16x4xf32> to vector<1xf32>
      %59 = vector.shape_cast %58 : vector<1xf32> to vector<1x1x1xf32>
      %60 = vector.extract %59[0, 0, 0] : f32 from vector<1x1x1xf32>
      %cst_30 = arith.constant 1.562500e-02 : f32
      %61 = arith.mulf %60, %cst_30 : f32
      %c0_31 = arith.constant 0 : index
      %c0_32 = arith.constant 0 : index
      %c0_33 = arith.constant 0 : index
      %62 = vector.load %arg7[%c0_31, %c0_32, %c0_33] : memref<1x8x128xf32, #tpu.memory_space<vmem>>, vector<1x8x128xf32>
      %63 = vector.shape_cast %62 : vector<1x8x128xf32> to vector<8x128xf32>
      %cst_34 = arith.constant 0.000000e+00 : f32
      %64 = vector.broadcast %61 : f32 to vector<8x128xf32>
      %65 = vector.broadcast %cst_34 : f32 to vector<8x128xf32>
      %66 = arith.select %35, %64, %65 : vector<8x128xi1>, vector<8x128xf32>
      %67 = arith.addf %63, %66 : vector<8x128xf32>
      %c0_35 = arith.constant 0 : index
      %c0_36 = arith.constant 0 : index
      %c0_37 = arith.constant 0 : index
      %68 = vector.load %arg7[%c0_35, %c0_36, %c0_37] : memref<1x8x128xf32, #tpu.memory_space<vmem>>, vector<1x8x128xf32>
      %69 = vector.shape_cast %68 : vector<1x8x128xf32> to vector<8x128xf32>
      %70 = vector.shape_cast %67 : vector<8x128xf32> to vector<1x8x128xf32>
      tpu.vector_store %arg7[%c0_35, %c0_36, %c0_37], %70 {strides = array<i32>} : memref<1x8x128xf32, #tpu.memory_space<vmem>>, vector<1x8x128xf32>,
    } else {
    }
    return
  }
  func.func @transform_0(%arg0: i32) -> (i32, i32) {
    %c0_i32 = arith.constant 0 : i32
    %c0_i32_0 = arith.constant 0 : i32
    %c0_i32_1 = arith.constant 0 : i32
    return %c0_i32, %c0_i32_0 : i32, i32
  }
  func.func @transform_1(%arg0: i32) -> (i32, i32) {
    %c0_i32 = arith.constant 0 : i32
    %c0_i32_0 = arith.constant 0 : i32
    %c0_i32_1 = arith.constant 0 : i32
    return %c0_i32, %c0_i32_0 : i32, i32
  }
  func.func @transform_2(%arg0: i32) -> (i32, i32, i32, i32) {
    %c0_i32 = arith.constant 0 : i32
    %c0_i32_0 = arith.constant 0 : i32
    %c0_i32_1 = arith.constant 0 : i32
    %c0_i32_2 = arith.constant 0 : i32
    return %arg0, %c0_i32, %c0_i32_0, %c0_i32_1 : i32, i32, i32, i32
  }
  func.func @transform_3(%arg0: i32) -> (i32, i32, i32) {
    %c0_i32 = arith.constant 0 : i32
    %c0_i32_0 = arith.constant 0 : i32
    %c0_i32_1 = arith.constant 0 : i32
    return %arg0, %c0_i32, %c0_i32_0 : i32, i32, i32
  }
  func.func @transform_4(%arg0: i32) -> (i32, i32) {
    %c0_i32 = arith.constant 0 : i32
    %c0_i32_0 = arith.constant 0 : i32
    %c0_i32_1 = arith.constant 0 : i32
    return %c0_i32, %c0_i32_0 : i32, i32
  }
  func.func @transform_5(%arg0: i32) -> (i32, i32) {
    %c0_i32 = arith.constant 0 : i32
    %c0_i32_0 = arith.constant 0 : i32
    %c0_i32_1 = arith.constant 0 : i32
    return %c0_i32, %c0_i32_0 : i32, i32
  }
  func.func @transform_6(%arg0: i32) -> (i32, i32, i32) {
    %c0_i32 = arith.constant 0 : i32
    %c0_i32_0 = arith.constant 0 : i32
    %c0_i32_1 = arith.constant 0 : i32
    return %arg0, %c0_i32, %c0_i32_0 : i32, i32, i32
  }
}

</mosaic_0001>

<llo_original>
// kernel: tpu_custom_call.1
$region0: #{tpu_custom_call.1}
  #allocation0 [shape = 'u32[]', space=smem, size = 0x4, offset = 0x4, fixed_abs, tag = 'smem constant byte address 0x4 - core index']
  #allocation1 [shape = 'u32[72,128]{1,0:T(1,128)}', space=vmem, size = 0x9000, scoped, tag = 'internal scratch']
  %s0 = inlined_call_operand.vmem [shape: f32[16,4], index: 0, kind: input, shape index: {}]
  %s1 = inlined_call_operand.vmem [shape: f32[16,4], index: 1, kind: input, shape index: {}]
  %s2 = inlined_call_operand.hbm [shape: f32[16,4,16,16], index: 2, kind: input, shape index: {}]
  %s3 = inlined_call_operand.hbm [shape: bf16[16,32,32], index: 3, kind: input, shape index: {}]
  %s4 = inlined_call_operand.vmem [shape: bf16[16,32], index: 4, kind: input, shape index: {}]
  %s5 = inlined_call_operand.vmem [shape: bf16[32,16], index: 5, kind: input, shape index: {}]
  %s6 = inlined_call_operand.hbm [shape: f32[2,8,128], index: 6, kind: output, shape index: {}]
  %s7 = sld [smem:[#allocation0]]
  $region69: #{tpu_custom_call.1} parent=0
    _
  %s9 = ssub.s32 1, %s7
  %s10 = scalar_select 0, %s9, %s7
  $region1: #{tpu_custom_call.1} parent=0
    #allocation2 [shape = 'u8[524288]{0}', space=vmem, size = 0x80000, scoped, tag = 'input window, operand 2']
    #allocation3 [shape = 's32[2]{0}', space=sflag, size = 0x8, scoped, tag = 'scoped memory for tpu_custom_call.1']
    #allocation4 [shape = 's32[2]{0}', space=sflag, size = 0x8, scoped, tag = 'scoped memory for tpu_custom_call.1']
    #allocation5 [shape = 'u8[131072]{0}', space=vmem, size = 0x20000, scoped, tag = 'input window, operand 3']
    #allocation6 [shape = 's32[2]{0}', space=sflag, size = 0x8, scoped, tag = 'scoped memory for tpu_custom_call.1']
    #allocation7 [shape = 'u8[8192]{0}', space=vmem, size = 0x2000, scoped, tag = 'output window, operand 0']
    %11 = vsyncpa [#allocation3], 0
    %s12 = scalar_lea.sflag [#allocation3], 1
    %13 = vsyncpa %s12, 0
    %14 = vsyncpa [#allocation6], 0
    %s15 = scalar_lea.sflag [#allocation6], 1
    %16 = vsyncpa %s15, 0
    %17 = vsyncpa [#allocation4], 0
    %s18 = scalar_lea.sflag [#allocation4], 1
    %19 = vsyncpa %s18, 0
    loop: start=0, step=1, limit=4
    $region2: #{tpu_custom_call.1} parent=1 // loop_pre_header
      _
    $region3: #{tpu_custom_call.1} parent=1 // loop_header
      %s21 = sphi 0, %s25
      %p22 = scmp.ge.s32.totalorder %s21, 4
      %s29 = sphi 0, %s29
      %s31 = sphi 0, %s29
      %s32 = sphi 0, %s31
      %s46 = sphi 0, %s32
      %s50 = sphi 0, %s50
      %s52 = sphi 0, %s50
      %s53 = sphi 0, %s52
      %s67 = sphi 0, %s53
      %s73 = sphi 0, %s75
      %s76 = sphi 0, %s73
      %s77 = sphi 0, %s76
      %s93 = sphi 0, %s77
      %s99 = sphi 0, %s101
      %s102 = sphi 0, %s99
      %s103 = sphi 0, %s102
      %s119 = sphi 0, %s103
      %s123 = sphi 0, %s123
      %s125 = sphi 0, %s123
      %s126 = sphi 0, %s125
      %s140 = sphi 0, %s126
      %s144 = sphi 0, %s144
      %s146 = sphi 0, %s144
      %s147 = sphi 0, %s146
      %s161 = sphi 0, %s147
      %s167 = sphi 0, %s169
      %s170 = sphi 0, %s167
      %s171 = sphi 0, %s170
      %s187 = sphi 0, %s171
    $region4: #{tpu_custom_call.1} parent=1 // loop_header_branch
      %24 = sbr.rel (%p22) target = $region8
    $region5: #{tpu_custom_call.1} parent=1 // loop_body
      %s26 = ssub.s32 %s21, 1
      %s27 = ssub.s32 %s21, 2
      %s28 = sadd.s32 %s21, 1
      %s30 = sadd.s32 %s29, 1
      %p33 = scmp.eq.s32.totalorder %s21, 1
      %p34 = scmp.ne.s32.totalorder %s29, %s31
      %p35 = scmp.eq.s32.totalorder %s21, 0
      %p36 = por %p34, %p35
      %p37 = scmp.ne.s32.totalorder %s29, %s31
      %p38 = scmp.eq.s32.totalorder %s26, 1
      %p39 = por %p37, %p38
      %p40 = scmp.ne.s32.totalorder %s31, %s32
      %p41 = scmp.eq.s32.totalorder %s26, 0
      %p42 = por %p40, %p41
      %p43 = scmp.ne.s32.totalorder %s31, %s32
      %p44 = scmp.eq.s32.totalorder %s27, 1
      %p45 = por %p43, %p44
      %p47 = scmp.ne.s32.totalorder %s32, %s46
      %p48 = scmp.eq.s32.totalorder %s27, 0
      %p49 = por %p47, %p48
      %s51 = sadd.s32 %s50, 1
      %p54 = scmp.eq.s32.totalorder %s21, 1
      %p55 = scmp.ne.s32.totalorder %s50, %s52
      %p56 = scmp.eq.s32.totalorder %s21, 0
      %p57 = por %p55, %p56
      %p58 = scmp.ne.s32.totalorder %s50, %s52
      %p59 = scmp.eq.s32.totalorder %s26, 1
      %p60 = por %p58, %p59
      %p61 = scmp.ne.s32.totalorder %s52, %s53
      %p62 = scmp.eq.s32.totalorder %s26, 0
      %p63 = por %p61, %p62
      %p64 = scmp.ne.s32.totalorder %s52, %s53
      %p65 = scmp.eq.s32.totalorder %s27, 1
      %p66 = por %p64, %p65
      %p68 = scmp.ne.s32.totalorder %s53, %s67
      %p69 = scmp.eq.s32.totalorder %s27, 0
      %p70 = por %p68, %p69
      %s71 = ssub.s32 %s21, %s28
      %p72 = scmp.eq.s32.totalorder %s71, 0
      %s74 = sadd.s32 %s73, 1
      %s75 = scalar_select %p72, %s73, %s74
      %p78 = pneg %p72
      %p79 = scmp.eq.s32.totalorder %s21, 1
      %p80 = por %p78, %p79
      %p81 = scmp.ne.s32.totalorder %s73, %s76
      %p82 = scmp.eq.s32.totalorder %s21, 0
      %p83 = por %p81, %p82
      %p84 = scmp.ne.s32.totalorder %s73, %s76
      %p85 = scmp.eq.s32.totalorder %s26, 1
      %p86 = por %p84, %p85
      %p87 = scmp.ne.s32.totalorder %s76, %s77
      %p88 = scmp.eq.s32.totalorder %s26, 0
      %p89 = por %p87, %p88
      %p90 = scmp.ne.s32.totalorder %s76, %s77
      %p91 = scmp.eq.s32.totalorder %s27, 1
      %p92 = por %p90, %p91
      %p94 = scmp.ne.s32.totalorder %s77, %s93
      %p95 = scmp.eq.s32.totalorder %s27, 0
      %p96 = por %p94, %p95
      %s97 = ssub.s32 %s21, %s28
      %p98 = scmp.eq.s32.totalorder %s97, 0
      %s100 = sadd.s32 %s99, 1
      %s101 = scalar_select %p98, %s99, %s100
      %p104 = pneg %p98
      %p105 = scmp.eq.s32.totalorder %s21, 1
      %p106 = por %p104, %p105
      %p107 = scmp.ne.s32.totalorder %s99, %s102
      %p108 = scmp.eq.s32.totalorder %s21, 0
      %p109 = por %p107, %p108
      %p110 = scmp.ne.s32.totalorder %s99, %s102
      %p111 = scmp.eq.s32.totalorder %s26, 1
      %p112 = por %p110, %p111
      %p113 = scmp.ne.s32.totalorder %s102, %s103
      %p114 = scmp.eq.s32.totalorder %s26, 0
      %p115 = por %p113, %p114
      %p116 = scmp.ne.s32.totalorder %s102, %s103
      %p117 = scmp.eq.s32.totalorder %s27, 1
      %p118 = por %p116, %p117
      %p120 = scmp.ne.s32.totalorder %s103, %s119
      %p121 = scmp.eq.s32.totalorder %s27, 0
      %p122 = por %p120, %p121
      %s124 = sadd.s32 %s123, 1
      %p127 = scmp.eq.s32.totalorder %s21, 1
      %p128 = scmp.ne.s32.totalorder %s123, %s125
      %p129 = scmp.eq.s32.totalorder %s21, 0
      %p130 = por %p128, %p129
      %p131 = scmp.ne.s32.totalorder %s123, %s125
      %p132 = scmp.eq.s32.totalorder %s26, 1
      %p133 = por %p131, %p132
      %p134 = scmp.ne.s32.totalorder %s125, %s126
      %p135 = scmp.eq.s32.totalorder %s26, 0
      %p136 = por %p134, %p135
      %p137 = scmp.ne.s32.totalorder %s125, %s126
      %p138 = scmp.eq.s32.totalorder %s27, 1
      %p139 = por %p137, %p138
      %p141 = scmp.ne.s32.totalorder %s126, %s140
      %p142 = scmp.eq.s32.totalorder %s27, 0
      %p143 = por %p141, %p142
      %s145 = sadd.s32 %s144, 1
      %p148 = scmp.eq.s32.totalorder %s21, 1
      %p149 = scmp.ne.s32.totalorder %s144, %s146
      %p150 = scmp.eq.s32.totalorder %s21, 0
      %p151 = por %p149, %p150
      %p152 = scmp.ne.s32.totalorder %s144, %s146
      %p153 = scmp.eq.s32.totalorder %s26, 1
      %p154 = por %p152, %p153
      %p155 = scmp.ne.s32.totalorder %s146, %s147
      %p156 = scmp.eq.s32.totalorder %s26, 0
      %p157 = por %p155, %p156
      %p158 = scmp.ne.s32.totalorder %s146, %s147
      %p159 = scmp.eq.s32.totalorder %s27, 1
      %p160 = por %p158, %p159
      %p162 = scmp.ne.s32.totalorder %s147, %s161
      %p163 = scmp.eq.s32.totalorder %s27, 0
      %p164 = por %p162, %p163
      %s165 = ssub.s32 %s21, %s28
      %p166 = scmp.eq.s32.totalorder %s165, 0
      %s168 = sadd.s32 %s167, 1
      %s169 = scalar_select %p166, %s167, %s168
      %p172 = pneg %p166
      %p173 = scmp.eq.s32.totalorder %s21, 1
      %p174 = por %p172, %p173
      %p175 = scmp.ne.s32.totalorder %s167, %s170
      %p176 = scmp.eq.s32.totalorder %s21, 0
      %p177 = por %p175, %p176
      %p178 = scmp.ne.s32.totalorder %s167, %s170
      %p179 = scmp.eq.s32.totalorder %s26, 1
      %p180 = por %p178, %p179
      %p181 = scmp.ne.s32.totalorder %s170, %s171
      %p182 = scmp.eq.s32.totalorder %s26, 0
      %p183 = por %p181, %p182
      %p184 = scmp.ne.s32.totalorder %s170, %s171
      %p185 = scmp.eq.s32.totalorder %s27, 1
      %p186 = por %p184, %p185
      %p188 = scmp.ne.s32.totalorder %s171, %s187
      %p189 = scmp.eq.s32.totalorder %s27, 0
      %p190 = por %p188, %p189
      %p191 = scmp.le.s32.totalorder 1, %s21
      %p192 = scmp.lt.s32.totalorder %s21, 3
      %p193 = pnand %p191, %p192
      %p194 = pneg %p193
      // Predicated region
      $region9: #{tpu_custom_call.1} parent=5 // pred_check
        _
      $region10: #{tpu_custom_call.1} parent=5 // pred_check_branch
        %196 = sbr.rel (%p193) target = $region12
      $region11: #{tpu_custom_call.1} parent=5 // pred_region
        %s197 = ssub.s32 %s21, 1
        // Predicated region
        $region13: #{tpu_custom_call.1} parent=11 // pred_check
          %p198 = pneg %p42
        $region14: #{tpu_custom_call.1} parent=11 // pred_check_branch
          %200 = sbr.rel (%p198) target = $region16
        $region15: #{tpu_custom_call.1} parent=11 // pred_region
          _
        $region16: #{tpu_custom_call.1} parent=11 // pred_fallthru
          _
        // Predicated region
        $region17: #{tpu_custom_call.1} parent=11 // pred_check
          %p201 = pneg %p63
        $region18: #{tpu_custom_call.1} parent=11 // pred_check_branch
          %203 = sbr.rel (%p201) target = $region20
        $region19: #{tpu_custom_call.1} parent=11 // pred_region
          _
        $region20: #{tpu_custom_call.1} parent=11 // pred_fallthru
          _
        // Predicated region
        $region21: #{tpu_custom_call.1} parent=11 // pred_check
          %p204 = pneg %p136
        $region22: #{tpu_custom_call.1} parent=11 // pred_check_branch
          %206 = sbr.rel (%p204) target = $region24
        $region23: #{tpu_custom_call.1} parent=11 // pred_region
          _
        $region24: #{tpu_custom_call.1} parent=11 // pred_fallthru
          _
        // Predicated region
        $region25: #{tpu_custom_call.1} parent=11 // pred_check
          %p207 = pneg %p157
        $region26: #{tpu_custom_call.1} parent=11 // pred_check_branch
          %209 = sbr.rel (%p207) target = $region28
        $region27: #{tpu_custom_call.1} parent=11 // pred_region
          _
        $region28: #{tpu_custom_call.1} parent=11 // pred_fallthru
          _
      $region12: #{tpu_custom_call.1} parent=5 // pred_fallthru
        _
      %p210 = scmp.lt.s32.totalorder %s21, 2
      // Predicated region
      $region29: #{tpu_custom_call.1} parent=5 // pred_check
        %p211 = pneg %p210
      $region30: #{tpu_custom_call.1} parent=5 // pred_check_branch
        %213 = sbr.rel (%p211) target = $region32
      $region31: #{tpu_custom_call.1} parent=5 // pred_region
        // Predicated region
        $region33: #{tpu_custom_call.1} parent=31 // pred_check
          %p214 = pneg %p83
        $region34: #{tpu_custom_call.1} parent=31 // pred_check_branch
          %216 = sbr.rel (%p214) target = $region36
        $region35: #{tpu_custom_call.1} parent=31 // pred_region
          %s217 = sand.u32 %s73, 1
          %s218 = scalar_lea.sflag [#allocation3], %s217
          %s219 = sand.u32 %s73, 1
          %s220 = smul.addr %s219, 512
          %s221 = scalar_lea.vmem [#allocation2], %s220
          %s222 = smul.u32 8, %s21
          %224 = vsyncadd %s218, 0
          %s225 = smul.addr %s222, 8
          %s226 = smul.addr %s225, 8
          %s227 = scalar_lea.hbm %s2, %s226
          %s228 = sshll.u32 %s227, 4
          %s229 = int_to_ptr.hbm [resolvable:$true] %s228
          %s230 = sshll.u32 %s221, 4
          %s231 = int_to_ptr.vmem [resolvable:$true] %s230
          %236 = dma.hbm_to_vmem [thread:$0]  %s229, 8192, %s231, %s218, 128, 128, 8
        $region36: #{tpu_custom_call.1} parent=31 // pred_fallthru
          _
        // Predicated region
        $region37: #{tpu_custom_call.1} parent=31 // pred_check
          %p237 = pneg %p109
        $region38: #{tpu_custom_call.1} parent=31 // pred_check_branch
          %239 = sbr.rel (%p237) target = $region40
        $region39: #{tpu_custom_call.1} parent=31 // pred_region
          %s240 = sand.u32 %s99, 1
          %s241 = scalar_lea.sflag [#allocation6], %s240
          %s242 = sand.u32 %s99, 1
          %s243 = smul.addr %s242, 128
          %s244 = scalar_lea.vmem [#allocation5], %s243
          %s245 = smul.u32 8, %s21
          %247 = vsyncadd %s241, 0
          %s248 = smul.addr %s245, 4
          %s249 = smul.addr %s248, 4
          %s250 = scalar_lea.hbm %s3, %s249
          %s251 = sshll.u32 %s250, 4
          %s252 = int_to_ptr.hbm [resolvable:$true] %s251
          %s253 = sshll.u32 %s244, 4
          %s254 = int_to_ptr.vmem [resolvable:$true] %s253
          %259 = dma.hbm_to_vmem [thread:$0]  %s252, 2048, %s254, %s241, 64, 64, 4
        $region40: #{tpu_custom_call.1} parent=31 // pred_fallthru
          _
      $region32: #{tpu_custom_call.1} parent=5 // pred_fallthru
        _
      %p260 = scmp.le.s32.totalorder 1, %s21
      %p261 = scmp.lt.s32.totalorder %s21, 3
      %p262 = pnand %p260, %p261
      %p263 = pneg %p262
      // Predicated region
      $region41: #{tpu_custom_call.1} parent=5 // pred_check
        _
      $region42: #{tpu_custom_call.1} parent=5 // pred_check_branch
        %265 = sbr.rel (%p262) target = $region44
      $region43: #{tpu_custom_call.1} parent=5 // pred_region
        %s266 = ssub.s32 %s21, 1
        %s267 = sand.u32 %s76, 1
        %s268 = scalar_lea.sflag [#allocation3], %s267
        %s269 = sand.u32 %s76, 1
        %s270 = smul.addr %s269, 512
        %s271 = scalar_lea.vmem [#allocation2], %s270
        // Predicated region
        $region45: #{tpu_custom_call.1} parent=43 // pred_check
          %p272 = pneg %p89
        $region46: #{tpu_custom_call.1} parent=43 // pred_check_branch
          %274 = sbr.rel (%p272) target = $region48
        $region47: #{tpu_custom_call.1} parent=43 // pred_region
          %276 = dma.done %s268, 8192
        $region48: #{tpu_custom_call.1} parent=43 // pred_fallthru
          _
        %s277 = sand.u32 %s102, 1
        %s278 = scalar_lea.sflag [#allocation6], %s277
        %s279 = sand.u32 %s102, 1
        %s280 = smul.addr %s279, 128
        %s281 = scalar_lea.vmem [#allocation5], %s280
        // Predicated region
        $region49: #{tpu_custom_call.1} parent=43 // pred_check
          %p282 = pneg %p115
        $region50: #{tpu_custom_call.1} parent=43 // pred_check_branch
          %284 = sbr.rel (%p282) target = $region52
        $region51: #{tpu_custom_call.1} parent=43 // pred_region
          %286 = dma.done %s278, 2048
        $region52: #{tpu_custom_call.1} parent=43 // pred_fallthru
          _
        %p287 = pneg %p42
        %p288 = pneg %p39
        %p289 = pneg %p63
        %p290 = pneg %p60
        %s291 = sand.u32 %s76, 1
        %s292 = scalar_lea.sflag [#allocation3], %s291
        %s293 = sand.u32 %s76, 1
        %s294 = smul.addr %s293, 512
        %s295 = scalar_lea.vmem [#allocation2], %s294
        %p296 = pneg %p89
        %p297 = pneg %p86
        %s298 = sand.u32 %s102, 1
        %s299 = scalar_lea.sflag [#allocation6], %s298
        %s300 = sand.u32 %s102, 1
        %s301 = smul.addr %s300, 128
        %s302 = scalar_lea.vmem [#allocation5], %s301
        %p303 = pneg %p115
        %p304 = pneg %p112
        %p305 = pneg %p136
        %p306 = pneg %p133
        %p307 = pneg %p157
        %p308 = pneg %p154
        %p309 = pneg %p183
        %p310 = pneg %p180
        %s311 = sand.u32 %s170, 1
        %s312 = scalar_lea.sflag [#allocation4], %s311
        %s313 = sand.u32 %s170, 1
        %s314 = smul.addr %s313, 8
        %s315 = scalar_lea.vmem [#allocation7], %s314
        %s316 = smul.u32 8, %s26
        %s317 = smul.u32 8, %s26
        %v319 = vld [vmem:[%s281] sm:$0xf]
        %v320 = vld [vmem:[%s281 + $0x4] sm:$0xf]
        %v321 = vld [vmem:[%s281 + $0x8] sm:$0xf]
        %v322 = vld [vmem:[%s281 + $0xc] sm:$0xf]
        %v323 = vld [vmem:[%s281 + $0x10] sm:$0xf]
        %v324 = vld [vmem:[%s281 + $0x14] sm:$0xf]
        %v325 = vld [vmem:[%s281 + $0x18] sm:$0xf]
        %v326 = vld [vmem:[%s281 + $0x1c] sm:$0xf]
        %v327 = vld [vmem:[%s281 + $0x20] sm:$0xf]
        %v328 = vld [vmem:[%s281 + $0x24] sm:$0xf]
        %v329 = vld [vmem:[%s281 + $0x28] sm:$0xf]
        %v330 = vld [vmem:[%s281 + $0x2c] sm:$0xf]
        %v331 = vld [vmem:[%s281 + $0x30] sm:$0xf]
        %v332 = vld [vmem:[%s281 + $0x34] sm:$0xf]
        %v333 = vld [vmem:[%s281 + $0x38] sm:$0xf]
        %v334 = vld [vmem:[%s281 + $0x3c] sm:$0xf]
        %v335 = vld [vmem:[%s281 + $0x40] sm:$0xf]
        %v336 = vld [vmem:[%s281 + $0x44] sm:$0xf]
        %v337 = vld [vmem:[%s281 + $0x48] sm:$0xf]
        %v338 = vld [vmem:[%s281 + $0x4c] sm:$0xf]
        %v339 = vld [vmem:[%s281 + $0x50] sm:$0xf]
        %v340 = vld [vmem:[%s281 + $0x54] sm:$0xf]
        %v341 = vld [vmem:[%s281 + $0x58] sm:$0xf]
        %v342 = vld [vmem:[%s281 + $0x5c] sm:$0xf]
        %v343 = vld [vmem:[%s281 + $0x60] sm:$0xf]
        %v344 = vld [vmem:[%s281 + $0x64] sm:$0xf]
        %v345 = vld [vmem:[%s281 + $0x68] sm:$0xf]
        %v346 = vld [vmem:[%s281 + $0x6c] sm:$0xf]
        %v347 = vld [vmem:[%s281 + $0x70] sm:$0xf]
        %v348 = vld [vmem:[%s281 + $0x74] sm:$0xf]
        %v349 = vld [vmem:[%s281 + $0x78] sm:$0xf]
        %v350 = vld [vmem:[%s281 + $0x7c] sm:$0xf]
        %v351 = vld [vmem:[%s4] sm:$0xf]
        %v352 = vld [vmem:[%s4 + $0x4] sm:$0xf]
        %v353 = vld [vmem:[%s5] sm:$0xf]
        %v354 = vld [vmem:[%s5 + $0x4] sm:$0xf]
        %v355 = vld [vmem:[%s5 + $0x8] sm:$0xf]
        %v356 = vld [vmem:[%s5 + $0xc] sm:$0xf]
        %v359 = vunpack.c.l.b16 %v351
        %v360 = vunpack.c.l.b16 %v352
        %v361 = vpack.c.b16 %v360, %v359
        %v366 = vunpack.c.l.b16 %v319
        %v367 = vunpack.c.l.b16 %v320
        %v368 = vunpack.c.l.b16 %v321
        %v369 = vunpack.c.l.b16 %v322
        %v370 = vpack.c.b16 %v367, %v366
        %v371 = vpack.c.b16 %v369, %v368
        %vm374 = vcmask 261120
        %v376 = vsel %vm374, %v361, 0
        %378 = vmatpush.bf16.msra.mxu0 0
        %379 = vmatpush.bf16.msra.mxu0 0
        %380 = vmatpush.bf16.msra.mxu0 0
        %381 = vmatpush.bf16.msra.mxu0 0
        %382 = vmatpush.bf16.msra.mxu0 0
        %383 = vmatpush.bf16.msra.mxu0 0
        %384 = vmatpush.bf16.msra.mxu0 %v371
        %385 = vmatpush.bf16.msra.mxu0 %v370
        %386 = vmatmul.bf16.gmra.mxu0 %v376
        %v387 = vpop.f32.mrf.mxu0
        %v388 = vadd.f32 0.0, %v387
        %v389 = vpop.f32.mrf.mxu0
        %v390 = vadd.f32 0.0, %v389
        %391 = vdwg.mxu0
        %v396 = vunpack.c.l.b16 %v323
        %v397 = vunpack.c.l.b16 %v324
        %v398 = vunpack.c.l.b16 %v325
        %v399 = vunpack.c.l.b16 %v326
        %v400 = vpack.c.b16 %v397, %v396
        %v401 = vpack.c.b16 %v399, %v398
        %404 = vmatpush.bf16.msra.mxu0 0
        %405 = vmatpush.bf16.msra.mxu0 0
        %406 = vmatpush.bf16.msra.mxu0 0
        %407 = vmatpush.bf16.msra.mxu0 0
        %408 = vmatpush.bf16.msra.mxu0 0
        %409 = vmatpush.bf16.msra.mxu0 0
        %410 = vmatpush.bf16.msra.mxu0 %v401
        %411 = vmatpush.bf16.msra.mxu0 %v400
        %412 = vmatmul.bf16.gmra.mxu0 %v376
        %v413 = vpop.f32.mrf.mxu0
        %v414 = vadd.f32 0.0, %v413
        %v415 = vpop.f32.mrf.mxu0
        %v416 = vadd.f32 0.0, %v415
        %417 = vdwg.mxu0
        %v422 = vunpack.c.l.b16 %v327
        %v423 = vunpack.c.l.b16 %v328
        %v424 = vunpack.c.l.b16 %v329
        %v425 = vunpack.c.l.b16 %v330
        %v426 = vpack.c.b16 %v423, %v422
        %v427 = vpack.c.b16 %v425, %v424
        %430 = vmatpush.bf16.msra.mxu0 0
        %431 = vmatpush.bf16.msra.mxu0 0
        %432 = vmatpush.bf16.msra.mxu0 0
        %433 = vmatpush.bf16.msra.mxu0 0
        %434 = vmatpush.bf16.msra.mxu0 0
        %435 = vmatpush.bf16.msra.mxu0 0
        %436 = vmatpush.bf16.msra.mxu0 %v427
        %437 = vmatpush.bf16.msra.mxu0 %v426
        %438 = vmatmul.bf16.gmra.mxu0 %v376
        %v439 = vpop.f32.mrf.mxu0
        %v440 = vadd.f32 0.0, %v439
        %v441 = vpop.f32.mrf.mxu0
        %v442 = vadd.f32 0.0, %v441
        %443 = vdwg.mxu0
        %v448 = vunpack.c.l.b16 %v331
        %v449 = vunpack.c.l.b16 %v332
        %v450 = vunpack.c.l.b16 %v333
        %v451 = vunpack.c.l.b16 %v334
        %v452 = vpack.c.b16 %v449, %v448
        %v453 = vpack.c.b16 %v451, %v450
        %456 = vmatpush.bf16.msra.mxu0 0
        %457 = vmatpush.bf16.msra.mxu0 0
        %458 = vmatpush.bf16.msra.mxu0 0
        %459 = vmatpush.bf16.msra.mxu0 0
        %460 = vmatpush.bf16.msra.mxu0 0
        %461 = vmatpush.bf16.msra.mxu0 0
        %462 = vmatpush.bf16.msra.mxu0 %v453
        %463 = vmatpush.bf16.msra.mxu0 %v452
        %464 = vmatmul.bf16.gmra.mxu0 %v376
        %v465 = vpop.f32.mrf.mxu0
        %v466 = vadd.f32 0.0, %v465
        %v467 = vpop.f32.mrf.mxu0
        %v468 = vadd.f32 0.0, %v467
        %469 = vdwg.mxu0
        %v474 = vunpack.c.l.b16 %v335
        %v475 = vunpack.c.l.b16 %v336
        %v476 = vunpack.c.l.b16 %v337
        %v477 = vunpack.c.l.b16 %v338
        %v478 = vpack.c.b16 %v475, %v474
        %v479 = vpack.c.b16 %v477, %v476
        %482 = vmatpush.bf16.msra.mxu0 0
        %483 = vmatpush.bf16.msra.mxu0 0
        %484 = vmatpush.bf16.msra.mxu0 0
        %485 = vmatpush.bf16.msra.mxu0 0
        %486 = vmatpush.bf16.msra.mxu0 0
        %487 = vmatpush.bf16.msra.mxu0 0
        %488 = vmatpush.bf16.msra.mxu0 %v479
        %489 = vmatpush.bf16.msra.mxu0 %v478
        %490 = vmatmul.bf16.gmra.mxu0 %v376
        %v491 = vpop.f32.mrf.mxu0
        %v492 = vadd.f32 0.0, %v491
        %v493 = vpop.f32.mrf.mxu0
        %v494 = vadd.f32 0.0, %v493
        %495 = vdwg.mxu0
        %v500 = vunpack.c.l.b16 %v339
        %v501 = vunpack.c.l.b16 %v340
        %v502 = vunpack.c.l.b16 %v341
        %v503 = vunpack.c.l.b16 %v342
        %v504 = vpack.c.b16 %v501, %v500
        %v505 = vpack.c.b16 %v503, %v502
        %508 = vmatpush.bf16.msra.mxu0 0
        %509 = vmatpush.bf16.msra.mxu0 0
        %510 = vmatpush.bf16.msra.mxu0 0
        %511 = vmatpush.bf16.msra.mxu0 0
        %512 = vmatpush.bf16.msra.mxu0 0
        %513 = vmatpush.bf16.msra.mxu0 0
        %514 = vmatpush.bf16.msra.mxu0 %v505
        %515 = vmatpush.bf16.msra.mxu0 %v504
        %516 = vmatmul.bf16.gmra.mxu0 %v376
        %v517 = vpop.f32.mrf.mxu0
        %v518 = vadd.f32 0.0, %v517
        %v519 = vpop.f32.mrf.mxu0
        %v520 = vadd.f32 0.0, %v519
        %521 = vdwg.mxu0
        %v526 = vunpack.c.l.b16 %v343
        %v527 = vunpack.c.l.b16 %v344
        %v528 = vunpack.c.l.b16 %v345
        %v529 = vunpack.c.l.b16 %v346
        %v530 = vpack.c.b16 %v527, %v526
        %v531 = vpack.c.b16 %v529, %v528
        %534 = vmatpush.bf16.msra.mxu0 0
        %535 = vmatpush.bf16.msra.mxu0 0
        %536 = vmatpush.bf16.msra.mxu0 0
        %537 = vmatpush.bf16.msra.mxu0 0
        %538 = vmatpush.bf16.msra.mxu0 0
        %539 = vmatpush.bf16.msra.mxu0 0
        %540 = vmatpush.bf16.msra.mxu0 %v531
        %541 = vmatpush.bf16.msra.mxu0 %v530
        %542 = vmatmul.bf16.gmra.mxu0 %v376
        %v543 = vpop.f32.mrf.mxu0
        %v544 = vadd.f32 0.0, %v543
        %v545 = vpop.f32.mrf.mxu0
        %v546 = vadd.f32 0.0, %v545
        %547 = vdwg.mxu0
        %v552 = vunpack.c.l.b16 %v347
        %v553 = vunpack.c.l.b16 %v348
        %v554 = vunpack.c.l.b16 %v349
        %v555 = vunpack.c.l.b16 %v350
        %v556 = vpack.c.b16 %v553, %v552
        %v557 = vpack.c.b16 %v555, %v554
        %560 = vmatpush.bf16.msra.mxu0 0
        %561 = vmatpush.bf16.msra.mxu0 0
        %562 = vmatpush.bf16.msra.mxu0 0
        %563 = vmatpush.bf16.msra.mxu0 0
        %564 = vmatpush.bf16.msra.mxu0 0
        %565 = vmatpush.bf16.msra.mxu0 0
        %566 = vmatpush.bf16.msra.mxu0 %v557
        %567 = vmatpush.bf16.msra.mxu0 %v556
        %568 = vmatmul.bf16.gmra.mxu0 %v376
        %v569 = vpop.f32.mrf.mxu0
        %v570 = vadd.f32 0.0, %v569
        %v571 = vpop.f32.mrf.mxu0
        %v572 = vadd.f32 0.0, %v571
        %573 = vdwg.mxu0
        %v574 = vpack.c.bf16 %v388, %v388
        %v575 = vpack.c.bf16 %v390, %v390
        %v576 = vpack.c.bf16 %v414, %v414
        %v577 = vpack.c.bf16 %v416, %v416
        %v578 = vpack.c.bf16 %v440, %v440
        %v579 = vpack.c.bf16 %v442, %v442
        %v580 = vpack.c.bf16 %v466, %v466
        %v581 = vpack.c.bf16 %v468, %v468
        %v582 = vpack.c.bf16 %v492, %v492
        %v583 = vpack.c.bf16 %v494, %v494
        %v584 = vpack.c.bf16 %v518, %v518
        %v585 = vpack.c.bf16 %v520, %v520
        %v586 = vpack.c.bf16 %v544, %v544
        %v587 = vpack.c.bf16 %v546, %v546
        %v588 = vpack.c.bf16 %v570, %v570
        %v589 = vpack.c.bf16 %v572, %v572
        %v592 = vunpack.c.l.b16 %v574
        %v593 = vunpack.c.l.b16 %v575
        %v594 = vpack.c.b16 %v593, %v592
        %v599 = vunpack.c.l.b16 %v353
        %v600 = vunpack.c.l.b16 %v354
        %v601 = vunpack.c.l.b16 %v355
        %v602 = vunpack.c.l.b16 %v356
        %v603 = vpack.c.b16 %v600, %v599
        %v604 = vpack.c.b16 %v602, %v601
        %v608 = vsel %vm374, %v594, 0
        %610 = vmatpush.bf16.msra.mxu0 0
        %611 = vmatpush.bf16.msra.mxu0 0
        %612 = vmatpush.bf16.msra.mxu0 0
        %613 = vmatpush.bf16.msra.mxu0 0
        %614 = vmatpush.bf16.msra.mxu0 0
        %615 = vmatpush.bf16.msra.mxu0 0
        %616 = vmatpush.bf16.msra.mxu0 %v604
        %617 = vmatpush.bf16.msra.mxu0 %v603
        %618 = vmatmul.bf16.gmra.mxu0 %v608
        %v619 = vpop.f32.mrf.mxu0
        %v620 = vadd.f32 0.0, %v619
        %v621 = vpop.f32.mrf.mxu0
        %v622 = vadd.f32 0.0, %v621
        %623 = vdwg.mxu0
        %v626 = vunpack.c.l.b16 %v576
        %v627 = vunpack.c.l.b16 %v577
        %v628 = vpack.c.b16 %v627, %v626
        %v630 = vsel %vm374, %v628, 0
        %632 = vmatpush.bf16.msra.mxu0 0
        %633 = vmatpush.bf16.msra.mxu0 0
        %634 = vmatpush.bf16.msra.mxu0 0
        %635 = vmatpush.bf16.msra.mxu0 0
        %636 = vmatpush.bf16.msra.mxu0 0
        %637 = vmatpush.bf16.msra.mxu0 0
        %638 = vmatpush.bf16.msra.mxu0 %v604
        %639 = vmatpush.bf16.msra.mxu0 %v603
        %640 = vmatmul.bf16.gmra.mxu0 %v630
        %v641 = vpop.f32.mrf.mxu0
        %v642 = vadd.f32 0.0, %v641
        %v643 = vpop.f32.mrf.mxu0
        %v644 = vadd.f32 0.0, %v643
        %645 = vdwg.mxu0
        %v648 = vunpack.c.l.b16 %v578
        %v649 = vunpack.c.l.b16 %v579
        %v650 = vpack.c.b16 %v649, %v648
        %v652 = vsel %vm374, %v650, 0
        %654 = vmatpush.bf16.msra.mxu0 0
        %655 = vmatpush.bf16.msra.mxu0 0
        %656 = vmatpush.bf16.msra.mxu0 0
        %657 = vmatpush.bf16.msra.mxu0 0
        %658 = vmatpush.bf16.msra.mxu0 0
        %659 = vmatpush.bf16.msra.mxu0 0
        %660 = vmatpush.bf16.msra.mxu0 %v604
        %661 = vmatpush.bf16.msra.mxu0 %v603
        %662 = vmatmul.bf16.gmra.mxu0 %v652
        %v663 = vpop.f32.mrf.mxu0
        %v664 = vadd.f32 0.0, %v663
        %v665 = vpop.f32.mrf.mxu0
        %v666 = vadd.f32 0.0, %v665
        %667 = vdwg.mxu0
        %v670 = vunpack.c.l.b16 %v580
        %v671 = vunpack.c.l.b16 %v581
        %v672 = vpack.c.b16 %v671, %v670
        %v674 = vsel %vm374, %v672, 0
        %676 = vmatpush.bf16.msra.mxu0 0
        %677 = vmatpush.bf16.msra.mxu0 0
        %678 = vmatpush.bf16.msra.mxu0 0
        %679 = vmatpush.bf16.msra.mxu0 0
        %680 = vmatpush.bf16.msra.mxu0 0
        %681 = vmatpush.bf16.msra.mxu0 0
        %682 = vmatpush.bf16.msra.mxu0 %v604
        %683 = vmatpush.bf16.msra.mxu0 %v603
        %684 = vmatmul.bf16.gmra.mxu0 %v674
        %v685 = vpop.f32.mrf.mxu0
        %v686 = vadd.f32 0.0, %v685
        %v687 = vpop.f32.mrf.mxu0
        %v688 = vadd.f32 0.0, %v687
        %689 = vdwg.mxu0
        %v692 = vunpack.c.l.b16 %v582
        %v693 = vunpack.c.l.b16 %v583
        %v694 = vpack.c.b16 %v693, %v692
        %v696 = vsel %vm374, %v694, 0
        %698 = vmatpush.bf16.msra.mxu0 0
        %699 = vmatpush.bf16.msra.mxu0 0
        %700 = vmatpush.bf16.msra.mxu0 0
        %701 = vmatpush.bf16.msra.mxu0 0
        %702 = vmatpush.bf16.msra.mxu0 0
        %703 = vmatpush.bf16.msra.mxu0 0
        %704 = vmatpush.bf16.msra.mxu0 %v604
        %705 = vmatpush.bf16.msra.mxu0 %v603
        %706 = vmatmul.bf16.gmra.mxu0 %v696
        %v707 = vpop.f32.mrf.mxu0
        %v708 = vadd.f32 0.0, %v707
        %v709 = vpop.f32.mrf.mxu0
        %v710 = vadd.f32 0.0, %v709
        %711 = vdwg.mxu0
        %v714 = vunpack.c.l.b16 %v584
        %v715 = vunpack.c.l.b16 %v585
        %v716 = vpack.c.b16 %v715, %v714
        %v718 = vsel %vm374, %v716, 0
        %720 = vmatpush.bf16.msra.mxu0 0
        %721 = vmatpush.bf16.msra.mxu0 0
        %722 = vmatpush.bf16.msra.mxu0 0
        %723 = vmatpush.bf16.msra.mxu0 0
        %724 = vmatpush.bf16.msra.mxu0 0
        %725 = vmatpush.bf16.msra.mxu0 0
        %726 = vmatpush.bf16.msra.mxu0 %v604
        %727 = vmatpush.bf16.msra.mxu0 %v603
        %728 = vmatmul.bf16.gmra.mxu0 %v718
        %v729 = vpop.f32.mrf.mxu0
        %v730 = vadd.f32 0.0, %v729
        %v731 = vpop.f32.mrf.mxu0
        %v732 = vadd.f32 0.0, %v731
        %733 = vdwg.mxu0
        %v736 = vunpack.c.l.b16 %v586
        %v737 = vunpack.c.l.b16 %v587
        %v738 = vpack.c.b16 %v737, %v736
        %v740 = vsel %vm374, %v738, 0
        %742 = vmatpush.bf16.msra.mxu0 0
        %743 = vmatpush.bf16.msra.mxu0 0
        %744 = vmatpush.bf16.msra.mxu0 0
        %745 = vmatpush.bf16.msra.mxu0 0
        %746 = vmatpush.bf16.msra.mxu0 0
        %747 = vmatpush.bf16.msra.mxu0 0
        %748 = vmatpush.bf16.msra.mxu0 %v604
        %749 = vmatpush.bf16.msra.mxu0 %v603
        %750 = vmatmul.bf16.gmra.mxu0 %v740
        %v751 = vpop.f32.mrf.mxu0
        %v752 = vadd.f32 0.0, %v751
        %v753 = vpop.f32.mrf.mxu0
        %v754 = vadd.f32 0.0, %v753
        %755 = vdwg.mxu0
        %v758 = vunpack.c.l.b16 %v588
        %v759 = vunpack.c.l.b16 %v589
        %v760 = vpack.c.b16 %v759, %v758
        %v762 = vsel %vm374, %v760, 0
        %764 = vmatpush.bf16.msra.mxu0 0
        %765 = vmatpush.bf16.msra.mxu0 0
        %766 = vmatpush.bf16.msra.mxu0 0
        %767 = vmatpush.bf16.msra.mxu0 0
        %768 = vmatpush.bf16.msra.mxu0 0
        %769 = vmatpush.bf16.msra.mxu0 0
        %770 = vmatpush.bf16.msra.mxu0 %v604
        %771 = vmatpush.bf16.msra.mxu0 %v603
        %772 = vmatmul.bf16.gmra.mxu0 %v762
        %v773 = vpop.f32.mrf.mxu0
        %v774 = vadd.f32 0.0, %v773
        %v775 = vpop.f32.mrf.mxu0
        %v776 = vadd.f32 0.0, %v775
        %777 = vdwg.mxu0
        %vm778 = vcmp.eq.f32.partialorder %v620, 0.0
        %vm779 = vcmp.eq.f32.partialorder %v622, 0.0
        %vm780 = vcmp.eq.f32.partialorder %v642, 0.0
        %vm781 = vcmp.eq.f32.partialorder %v644, 0.0
        %vm782 = vcmp.eq.f32.partialorder %v664, 0.0
        %vm783 = vcmp.eq.f32.partialorder %v666, 0.0
        %vm784 = vcmp.eq.f32.partialorder %v686, 0.0
        %vm785 = vcmp.eq.f32.partialorder %v688, 0.0
        %vm786 = vcmp.eq.f32.partialorder %v708, 0.0
        %vm787 = vcmp.eq.f32.partialorder %v710, 0.0
        %vm788 = vcmp.eq.f32.partialorder %v730, 0.0
        %vm789 = vcmp.eq.f32.partialorder %v732, 0.0
        %vm790 = vcmp.eq.f32.partialorder %v752, 0.0
        %vm791 = vcmp.eq.f32.partialorder %v754, 0.0
        %vm792 = vcmp.eq.f32.partialorder %v774, 0.0
        %vm793 = vcmp.eq.f32.partialorder %v776, 0.0
        %v794 = vsel %vm778, 1, 0
        %v795 = vsel %vm779, 1, 0
        %v796 = vsel %vm780, 1, 0
        %v797 = vsel %vm781, 1, 0
        %v798 = vsel %vm782, 1, 0
        %v799 = vsel %vm783, 1, 0
        %v800 = vsel %vm784, 1, 0
        %v801 = vsel %vm785, 1, 0
        %v802 = vsel %vm786, 1, 0
        %v803 = vsel %vm787, 1, 0
        %v804 = vsel %vm788, 1, 0
        %v805 = vsel %vm789, 1, 0
        %v806 = vsel %vm790, 1, 0
        %v807 = vsel %vm791, 1, 0
        %v808 = vsel %vm792, 1, 0
        %v809 = vsel %vm793, 1, 0
        %v810 = vcvt.s32.f32 %v794
        %v811 = vcvt.s32.f32 %v795
        %v812 = vcvt.s32.f32 %v796
        %v813 = vcvt.s32.f32 %v797
        %v814 = vcvt.s32.f32 %v798
        %v815 = vcvt.s32.f32 %v799
        %v816 = vcvt.s32.f32 %v800
        %v817 = vcvt.s32.f32 %v801
        %v818 = vcvt.s32.f32 %v802
        %v819 = vcvt.s32.f32 %v803
        %v820 = vcvt.s32.f32 %v804
        %v821 = vcvt.s32.f32 %v805
        %v822 = vcvt.s32.f32 %v806
        %v823 = vcvt.s32.f32 %v807
        %v824 = vcvt.s32.f32 %v808
        %v825 = vcvt.s32.f32 %v809
        %v826 = vld [vmem:[%s271] sm:$0xff]
        %v827 = vld [vmem:[%s271 + $0x8] sm:$0xff]
        %v828 = vld [vmem:[%s271 + $0x10] sm:$0xff]
        %v829 = vld [vmem:[%s271 + $0x18] sm:$0xff]
        %v830 = vld [vmem:[%s271 + $0x20] sm:$0xff]
        %v831 = vld [vmem:[%s271 + $0x28] sm:$0xff]
        %v832 = vld [vmem:[%s271 + $0x30] sm:$0xff]
        %v833 = vld [vmem:[%s271 + $0x38] sm:$0xff]
        %v834 = vld [vmem:[%s271 + $0x40] sm:$0xff]
        %v835 = vld [vmem:[%s271 + $0x48] sm:$0xff]
        %v836 = vld [vmem:[%s271 + $0x50] sm:$0xff]
        %v837 = vld [vmem:[%s271 + $0x58] sm:$0xff]
        %v838 = vld [vmem:[%s271 + $0x60] sm:$0xff]
        %v839 = vld [vmem:[%s271 + $0x68] sm:$0xff]
        %v840 = vld [vmem:[%s271 + $0x70] sm:$0xff]
        %v841 = vld [vmem:[%s271 + $0x78] sm:$0xff]
        %v842 = vld [vmem:[%s271 + $0x80] sm:$0xff]
        %v843 = vld [vmem:[%s271 + $0x88] sm:$0xff]
        %v844 = vld [vmem:[%s271 + $0x90] sm:$0xff]
        %v845 = vld [vmem:[%s271 + $0x98] sm:$0xff]
        %v846 = vld [vmem:[%s271 + $0xa0] sm:$0xff]
        %v847 = vld [vmem:[%s271 + $0xa8] sm:$0xff]
        %v848 = vld [vmem:[%s271 + $0xb0] sm:$0xff]
        %v849 = vld [vmem:[%s271 + $0xb8] sm:$0xff]
        %v850 = vld [vmem:[%s271 + $0xc0] sm:$0xff]
        %v851 = vld [vmem:[%s271 + $0xc8] sm:$0xff]
        %v852 = vld [vmem:[%s271 + $0xd0] sm:$0xff]
        %v853 = vld [vmem:[%s271 + $0xd8] sm:$0xff]
        %v854 = vld [vmem:[%s271 + $0xe0] sm:$0xff]
        %v855 = vld [vmem:[%s271 + $0xe8] sm:$0xff]
        %v856 = vld [vmem:[%s271 + $0xf0] sm:$0xff]
        %v857 = vld [vmem:[%s271 + $0xf8] sm:$0xff]
        %v858 = vld [vmem:[%s271 + $0x100] sm:$0xff]
        %v859 = vld [vmem:[%s271 + $0x108] sm:$0xff]
        %v860 = vld [vmem:[%s271 + $0x110] sm:$0xff]
        %v861 = vld [vmem:[%s271 + $0x118] sm:$0xff]
        %v862 = vld [vmem:[%s271 + $0x120] sm:$0xff]
        %v863 = vld [vmem:[%s271 + $0x128] sm:$0xff]
        %v864 = vld [vmem:[%s271 + $0x130] sm:$0xff]
        %v865 = vld [vmem:[%s271 + $0x138] sm:$0xff]
        %v866 = vld [vmem:[%s271 + $0x140] sm:$0xff]
        %v867 = vld [vmem:[%s271 + $0x148] sm:$0xff]
        %v868 = vld [vmem:[%s271 + $0x150] sm:$0xff]
        %v869 = vld [vmem:[%s271 + $0x158] sm:$0xff]
        %v870 = vld [vmem:[%s271 + $0x160] sm:$0xff]
        %v871 = vld [vmem:[%s271 + $0x168] sm:$0xff]
        %v872 = vld [vmem:[%s271 + $0x170] sm:$0xff]
        %v873 = vld [vmem:[%s271 + $0x178] sm:$0xff]
        %v874 = vld [vmem:[%s271 + $0x180] sm:$0xff]
        %v875 = vld [vmem:[%s271 + $0x188] sm:$0xff]
        %v876 = vld [vmem:[%s271 + $0x190] sm:$0xff]
        %v877 = vld [vmem:[%s271 + $0x198] sm:$0xff]
        %v878 = vld [vmem:[%s271 + $0x1a0] sm:$0xff]
        %v879 = vld [vmem:[%s271 + $0x1a8] sm:$0xff]
        %v880 = vld [vmem:[%s271 + $0x1b0] sm:$0xff]
        %v881 = vld [vmem:[%s271 + $0x1b8] sm:$0xff]
        %v882 = vld [vmem:[%s271 + $0x1c0] sm:$0xff]
        %v883 = vld [vmem:[%s271 + $0x1c8] sm:$0xff]
        %v884 = vld [vmem:[%s271 + $0x1d0] sm:$0xff]
        %v885 = vld [vmem:[%s271 + $0x1d8] sm:$0xff]
        %v886 = vld [vmem:[%s271 + $0x1e0] sm:$0xff]
        %v887 = vld [vmem:[%s271 + $0x1e8] sm:$0xff]
        %v888 = vld [vmem:[%s271 + $0x1f0] sm:$0xff]
        %v889 = vld [vmem:[%s271 + $0x1f8] sm:$0xff]
        %v890 = vxor.u32 %v826, 2147483648
        %v891 = vxor.u32 %v827, 2147483648
        %v892 = vxor.u32 %v828, 2147483648
        %v893 = vxor.u32 %v829, 2147483648
        %v894 = vxor.u32 %v830, 2147483648
        %v895 = vxor.u32 %v831, 2147483648
        %v896 = vxor.u32 %v832, 2147483648
        %v897 = vxor.u32 %v833, 2147483648
        %v898 = vxor.u32 %v834, 2147483648
        %v899 = vxor.u32 %v835, 2147483648
        %v900 = vxor.u32 %v836, 2147483648
        %v901 = vxor.u32 %v837, 2147483648
        %v902 = vxor.u32 %v838, 2147483648
        %v903 = vxor.u32 %v839, 2147483648
        %v904 = vxor.u32 %v840, 2147483648
        %v905 = vxor.u32 %v841, 2147483648
        %v906 = vxor.u32 %v842, 2147483648
        %v907 = vxor.u32 %v843, 2147483648
        %v908 = vxor.u32 %v844, 2147483648
        %v909 = vxor.u32 %v845, 2147483648
        %v910 = vxor.u32 %v846, 2147483648
        %v911 = vxor.u32 %v847, 2147483648
        %v912 = vxor.u32 %v848, 2147483648
        %v913 = vxor.u32 %v849, 2147483648
        %v914 = vxor.u32 %v850, 2147483648
        %v915 = vxor.u32 %v851, 2147483648
        %v916 = vxor.u32 %v852, 2147483648
        %v917 = vxor.u32 %v853, 2147483648
        %v918 = vxor.u32 %v854, 2147483648
        %v919 = vxor.u32 %v855, 2147483648
        %v920 = vxor.u32 %v856, 2147483648
        %v921 = vxor.u32 %v857, 2147483648
        %v922 = vxor.u32 %v858, 2147483648
        %v923 = vxor.u32 %v859, 2147483648
        %v924 = vxor.u32 %v860, 2147483648
        %v925 = vxor.u32 %v861, 2147483648
        %v926 = vxor.u32 %v862, 2147483648
        %v927 = vxor.u32 %v863, 2147483648
        %v928 = vxor.u32 %v864, 2147483648
        %v929 = vxor.u32 %v865, 2147483648
        %v930 = vxor.u32 %v866, 2147483648
        %v931 = vxor.u32 %v867, 2147483648
        %v932 = vxor.u32 %v868, 2147483648
        %v933 = vxor.u32 %v869, 2147483648
        %v934 = vxor.u32 %v870, 2147483648
        %v935 = vxor.u32 %v871, 2147483648
        %v936 = vxor.u32 %v872, 2147483648
        %v937 = vxor.u32 %v873, 2147483648
        %v938 = vxor.u32 %v874, 2147483648
        %v939 = vxor.u32 %v875, 2147483648
        %v940 = vxor.u32 %v876, 2147483648
        %v941 = vxor.u32 %v877, 2147483648
        %v942 = vxor.u32 %v878, 2147483648
        %v943 = vxor.u32 %v879, 2147483648
        %v944 = vxor.u32 %v880, 2147483648
        %v945 = vxor.u32 %v881, 2147483648
        %v946 = vxor.u32 %v882, 2147483648
        %v947 = vxor.u32 %v883, 2147483648
        %v948 = vxor.u32 %v884, 2147483648
        %v949 = vxor.u32 %v885, 2147483648
        %v950 = vxor.u32 %v886, 2147483648
        %v951 = vxor.u32 %v887, 2147483648
        %v952 = vxor.u32 %v888, 2147483648
        %v953 = vxor.u32 %v889, 2147483648
        %v954 = vmul.f32 %v890, 1.442695
        %v955 = vpow.pop %v954
        %v956 = vmul.f32 %v891, 1.442695
        %v957 = vpow.pop %v956
        %v958 = vmul.f32 %v892, 1.442695
        %v959 = vpow.pop %v958
        %v960 = vmul.f32 %v893, 1.442695
        %v961 = vpow.pop %v960
        %v962 = vmul.f32 %v894, 1.442695
        %v963 = vpow.pop %v962
        %v964 = vmul.f32 %v895, 1.442695
        %v965 = vpow.pop %v964
        %v966 = vmul.f32 %v896, 1.442695
        %v967 = vpow.pop %v966
        %v968 = vmul.f32 %v897, 1.442695
        %v969 = vpow.pop %v968
        %v970 = vmul.f32 %v898, 1.442695
        %v971 = vpow.pop %v970
        %v972 = vmul.f32 %v899, 1.442695
        %v973 = vpow.pop %v972
        %v974 = vmul.f32 %v900, 1.442695
        %v975 = vpow.pop %v974
        %v976 = vmul.f32 %v901, 1.442695
        %v977 = vpow.pop %v976
        %v978 = vmul.f32 %v902, 1.442695
        %v979 = vpow.pop %v978
        %v980 = vmul.f32 %v903, 1.442695
        %v981 = vpow.pop %v980
        %v982 = vmul.f32 %v904, 1.442695
        %v983 = vpow.pop %v982
        %v984 = vmul.f32 %v905, 1.442695
        %v985 = vpow.pop %v984
        %v986 = vmul.f32 %v906, 1.442695
        %v987 = vpow.pop %v986
        %v988 = vmul.f32 %v907, 1.442695
        %v989 = vpow.pop %v988
        %v990 = vmul.f32 %v908, 1.442695
        %v991 = vpow.pop %v990
        %v992 = vmul.f32 %v909, 1.442695
        %v993 = vpow.pop %v992
        %v994 = vmul.f32 %v910, 1.442695
        %v995 = vpow.pop %v994
        %v996 = vmul.f32 %v911, 1.442695
        %v997 = vpow.pop %v996
        %v998 = vmul.f32 %v912, 1.442695
        %v999 = vpow.pop %v998
        %v1000 = vmul.f32 %v913, 1.442695
        %v1001 = vpow.pop %v1000
        %v1002 = vmul.f32 %v914, 1.442695
        %v1003 = vpow.pop %v1002
        %v1004 = vmul.f32 %v915, 1.442695
        %v1005 = vpow.pop %v1004
        %v1006 = vmul.f32 %v916, 1.442695
        %v1007 = vpow.pop %v1006
        %v1008 = vmul.f32 %v917, 1.442695
        %v1009 = vpow.pop %v1008
        %v1010 = vmul.f32 %v918, 1.442695
        %v1011 = vpow.pop %v1010
        %v1012 = vmul.f32 %v919, 1.442695
        %v1013 = vpow.pop %v1012
        %v1014 = vmul.f32 %v920, 1.442695
        %v1015 = vpow.pop %v1014
        %v1016 = vmul.f32 %v921, 1.442695
        %v1017 = vpow.pop %v1016
        %v1018 = vmul.f32 %v922, 1.442695
        %v1019 = vpow.pop %v1018
        %v1020 = vmul.f32 %v923, 1.442695
        %v1021 = vpow.pop %v1020
        %v1022 = vmul.f32 %v924, 1.442695
        %v1023 = vpow.pop %v1022
        %v1024 = vmul.f32 %v925, 1.442695
        %v1025 = vpow.pop %v1024
        %v1026 = vmul.f32 %v926, 1.442695
        %v1027 = vpow.pop %v1026
        %v1028 = vmul.f32 %v927, 1.442695
        %v1029 = vpow.pop %v1028
        %v1030 = vmul.f32 %v928, 1.442695
        %v1031 = vpow.pop %v1030
        %v1032 = vmul.f32 %v929, 1.442695
        %v1033 = vpow.pop %v1032
        %v1034 = vmul.f32 %v930, 1.442695
        %v1035 = vpow.pop %v1034
        %v1036 = vmul.f32 %v931, 1.442695
        %v1037 = vpow.pop %v1036
        %v1038 = vmul.f32 %v932, 1.442695
        %v1039 = vpow.pop %v1038
        %v1040 = vmul.f32 %v933, 1.442695
        %v1041 = vpow.pop %v1040
        %v1042 = vmul.f32 %v934, 1.442695
        %v1043 = vpow.pop %v1042
        %v1044 = vmul.f32 %v935, 1.442695
        %v1045 = vpow.pop %v1044
        %v1046 = vmul.f32 %v936, 1.442695
        %v1047 = vpow.pop %v1046
        %v1048 = vmul.f32 %v937, 1.442695
        %v1049 = vpow.pop %v1048
        %v1050 = vmul.f32 %v938, 1.442695
        %v1051 = vpow.pop %v1050
        %v1052 = vmul.f32 %v939, 1.442695
        %v1053 = vpow.pop %v1052
        %v1054 = vmul.f32 %v940, 1.442695
        %v1055 = vpow.pop %v1054
        %v1056 = vmul.f32 %v941, 1.442695
        %v1057 = vpow.pop %v1056
        %v1058 = vmul.f32 %v942, 1.442695
        %v1059 = vpow.pop %v1058
        %v1060 = vmul.f32 %v943, 1.442695
        %v1061 = vpow.pop %v1060
        %v1062 = vmul.f32 %v944, 1.442695
        %v1063 = vpow.pop %v1062
        %v1064 = vmul.f32 %v945, 1.442695
        %v1065 = vpow.pop %v1064
        %v1066 = vmul.f32 %v946, 1.442695
        %v1067 = vpow.pop %v1066
        %v1068 = vmul.f32 %v947, 1.442695
        %v1069 = vpow.pop %v1068
        %v1070 = vmul.f32 %v948, 1.442695
        %v1071 = vpow.pop %v1070
        %v1072 = vmul.f32 %v949, 1.442695
        %v1073 = vpow.pop %v1072
        %v1074 = vmul.f32 %v950, 1.442695
        %v1075 = vpow.pop %v1074
        %v1076 = vmul.f32 %v951, 1.442695
        %v1077 = vpow.pop %v1076
        %v1078 = vmul.f32 %v952, 1.442695
        %v1079 = vpow.pop %v1078
        %v1080 = vmul.f32 %v953, 1.442695
        %v1081 = vpow.pop %v1080
        %v1082 = vadd.f32 %v955, 1.0
        %v1083 = vadd.f32 %v957, 1.0
        %v1084 = vadd.f32 %v959, 1.0
        %v1085 = vadd.f32 %v961, 1.0
        %v1086 = vadd.f32 %v963, 1.0
        %v1087 = vadd.f32 %v965, 1.0
        %v1088 = vadd.f32 %v967, 1.0
        %v1089 = vadd.f32 %v969, 1.0
        %v1090 = vadd.f32 %v971, 1.0
        %v1091 = vadd.f32 %v973, 1.0
        %v1092 = vadd.f32 %v975, 1.0
        %v1093 = vadd.f32 %v977, 1.0
        %v1094 = vadd.f32 %v979, 1.0
        %v1095 = vadd.f32 %v981, 1.0
        %v1096 = vadd.f32 %v983, 1.0
        %v1097 = vadd.f32 %v985, 1.0
        %v1098 = vadd.f32 %v987, 1.0
        %v1099 = vadd.f32 %v989, 1.0
        %v1100 = vadd.f32 %v991, 1.0
        %v1101 = vadd.f32 %v993, 1.0
        %v1102 = vadd.f32 %v995, 1.0
        %v1103 = vadd.f32 %v997, 1.0
        %v1104 = vadd.f32 %v999, 1.0
        %v1105 = vadd.f32 %v1001, 1.0
        %v1106 = vadd.f32 %v1003, 1.0
        %v1107 = vadd.f32 %v1005, 1.0
        %v1108 = vadd.f32 %v1007, 1.0
        %v1109 = vadd.f32 %v1009, 1.0
        %v1110 = vadd.f32 %v1011, 1.0
        %v1111 = vadd.f32 %v1013, 1.0
        %v1112 = vadd.f32 %v1015, 1.0
        %v1113 = vadd.f32 %v1017, 1.0
        %v1114 = vadd.f32 %v1019, 1.0
        %v1115 = vadd.f32 %v1021, 1.0
        %v1116 = vadd.f32 %v1023, 1.0
        %v1117 = vadd.f32 %v1025, 1.0
        %v1118 = vadd.f32 %v1027, 1.0
        %v1119 = vadd.f32 %v1029, 1.0
        %v1120 = vadd.f32 %v1031, 1.0
        %v1121 = vadd.f32 %v1033, 1.0
        %v1122 = vadd.f32 %v1035, 1.0
        %v1123 = vadd.f32 %v1037, 1.0
        %v1124 = vadd.f32 %v1039, 1.0
        %v1125 = vadd.f32 %v1041, 1.0
        %v1126 = vadd.f32 %v1043, 1.0
        %v1127 = vadd.f32 %v1045, 1.0
        %v1128 = vadd.f32 %v1047, 1.0
        %v1129 = vadd.f32 %v1049, 1.0
        %v1130 = vadd.f32 %v1051, 1.0
        %v1131 = vadd.f32 %v1053, 1.0
        %v1132 = vadd.f32 %v1055, 1.0
        %v1133 = vadd.f32 %v1057, 1.0
        %v1134 = vadd.f32 %v1059, 1.0
        %v1135 = vadd.f32 %v1061, 1.0
        %v1136 = vadd.f32 %v1063, 1.0
        %v1137 = vadd.f32 %v1065, 1.0
        %v1138 = vadd.f32 %v1067, 1.0
        %v1139 = vadd.f32 %v1069, 1.0
        %v1140 = vadd.f32 %v1071, 1.0
        %v1141 = vadd.f32 %v1073, 1.0
        %v1142 = vadd.f32 %v1075, 1.0
        %v1143 = vadd.f32 %v1077, 1.0
        %v1144 = vadd.f32 %v1079, 1.0
        %v1145 = vadd.f32 %v1081, 1.0
        %v1146 = vrcp.pop %v1082
        %v1147 = vmul.f32 %v1082, %v1146
        %v1148 = vsub.f32 1.0, %v1147
        %v1149 = vmul.f32 %v1146, %v1148
        %v1150 = vadd.f32 %v1146, %v1149
        %vm1151 = vweird.f32 %v1082
        %vm1152 = vweird.f32 %v1146
        %vm1153 = vmor %vm1151, %vm1152
        %v1154 = vsel %vm1153, %v1146, %v1150
        %v1155 = vand.u32 2147483647, %v1082
        %vm1156 = vcmp.eq.f32.partialorder %v1155, 8.507059e+37
        %v1157 = vand.u32 %v1082, 2147483648
        %v1158 = vor.u32 1.1754944e-38, %v1157
        %v1159 = vsel %vm1156, %v1158, %v1154
        %v1160 = vmul.f32 1.0, %v1159
        %v1161 = vrcp.pop %v1083
        %v1162 = vmul.f32 %v1083, %v1161
        %v1163 = vsub.f32 1.0, %v1162
        %v1164 = vmul.f32 %v1161, %v1163
        %v1165 = vadd.f32 %v1161, %v1164
        %vm1166 = vweird.f32 %v1083
        %vm1167 = vweird.f32 %v1161
        %vm1168 = vmor %vm1166, %vm1167
        %v1169 = vsel %vm1168, %v1161, %v1165
        %v1170 = vand.u32 2147483647, %v1083
        %vm1171 = vcmp.eq.f32.partialorder %v1170, 8.507059e+37
        %v1172 = vand.u32 %v1083, 2147483648
        %v1173 = vor.u32 1.1754944e-38, %v1172
        %v1174 = vsel %vm1171, %v1173, %v1169
        %v1175 = vmul.f32 1.0, %v1174
        %v1176 = vrcp.pop %v1084
        %v1177 = vmul.f32 %v1084, %v1176
        %v1178 = vsub.f32 1.0, %v1177
        %v1179 = vmul.f32 %v1176, %v1178
        %v1180 = vadd.f32 %v1176, %v1179
        %vm1181 = vweird.f32 %v1084
        %vm1182 = vweird.f32 %v1176
        %vm1183 = vmor %vm1181, %vm1182
        %v1184 = vsel %vm1183, %v1176, %v1180
        %v1185 = vand.u32 2147483647, %v1084
        %vm1186 = vcmp.eq.f32.partialorder %v1185, 8.507059e+37
        %v1187 = vand.u32 %v1084, 2147483648
        %v1188 = vor.u32 1.1754944e-38, %v1187
        %v1189 = vsel %vm1186, %v1188, %v1184
        %v1190 = vmul.f32 1.0, %v1189
        %v1191 = vrcp.pop %v1085
        %v1192 = vmul.f32 %v1085, %v1191
        %v1193 = vsub.f32 1.0, %v1192
        %v1194 = vmul.f32 %v1191, %v1193
        %v1195 = vadd.f32 %v1191, %v1194
        %vm1196 = vweird.f32 %v1085
        %vm1197 = vweird.f32 %v1191
        %vm1198 = vmor %vm1196, %vm1197
        %v1199 = vsel %vm1198, %v1191, %v1195
        %v1200 = vand.u32 2147483647, %v1085
        %vm1201 = vcmp.eq.f32.partialorder %v1200, 8.507059e+37
        %v1202 = vand.u32 %v1085, 2147483648
        %v1203 = vor.u32 1.1754944e-38, %v1202
        %v1204 = vsel %vm1201, %v1203, %v1199
        %v1205 = vmul.f32 1.0, %v1204
        %v1206 = vrcp.pop %v1086
        %v1207 = vmul.f32 %v1086, %v1206
        %v1208 = vsub.f32 1.0, %v1207
        %v1209 = vmul.f32 %v1206, %v1208
        %v1210 = vadd.f32 %v1206, %v1209
        %vm1211 = vweird.f32 %v1086
        %vm1212 = vweird.f32 %v1206
        %vm1213 = vmor %vm1211, %vm1212
        %v1214 = vsel %vm1213, %v1206, %v1210
        %v1215 = vand.u32 2147483647, %v1086
        %vm1216 = vcmp.eq.f32.partialorder %v1215, 8.507059e+37
        %v1217 = vand.u32 %v1086, 2147483648
        %v1218 = vor.u32 1.1754944e-38, %v1217
        %v1219 = vsel %vm1216, %v1218, %v1214
        %v1220 = vmul.f32 1.0, %v1219
        %v1221 = vrcp.pop %v1087
        %v1222 = vmul.f32 %v1087, %v1221
        %v1223 = vsub.f32 1.0, %v1222
        %v1224 = vmul.f32 %v1221, %v1223
        %v1225 = vadd.f32 %v1221, %v1224
        %vm1226 = vweird.f32 %v1087
        %vm1227 = vweird.f32 %v1221
        %vm1228 = vmor %vm1226, %vm1227
        %v1229 = vsel %vm1228, %v1221, %v1225
        %v1230 = vand.u32 2147483647, %v1087
        %vm1231 = vcmp.eq.f32.partialorder %v1230, 8.507059e+37
        %v1232 = vand.u32 %v1087, 2147483648
        %v1233 = vor.u32 1.1754944e-38, %v1232
        %v1234 = vsel %vm1231, %v1233, %v1229
        %v1235 = vmul.f32 1.0, %v1234
        %v1236 = vrcp.pop %v1088
        %v1237 = vmul.f32 %v1088, %v1236
        %v1238 = vsub.f32 1.0, %v1237
        %v1239 = vmul.f32 %v1236, %v1238
        %v1240 = vadd.f32 %v1236, %v1239
        %vm1241 = vweird.f32 %v1088
        %vm1242 = vweird.f32 %v1236
        %vm1243 = vmor %vm1241, %vm1242
        %v1244 = vsel %vm1243, %v1236, %v1240
        %v1245 = vand.u32 2147483647, %v1088
        %vm1246 = vcmp.eq.f32.partialorder %v1245, 8.507059e+37
        %v1247 = vand.u32 %v1088, 2147483648
        %v1248 = vor.u32 1.1754944e-38, %v1247
        %v1249 = vsel %vm1246, %v1248, %v1244
        %v1250 = vmul.f32 1.0, %v1249
        %v1251 = vrcp.pop %v1089
        %v1252 = vmul.f32 %v1089, %v1251
        %v1253 = vsub.f32 1.0, %v1252
        %v1254 = vmul.f32 %v1251, %v1253
        %v1255 = vadd.f32 %v1251, %v1254
        %vm1256 = vweird.f32 %v1089
        %vm1257 = vweird.f32 %v1251
        %vm1258 = vmor %vm1256, %vm1257
        %v1259 = vsel %vm1258, %v1251, %v1255
        %v1260 = vand.u32 2147483647, %v1089
        %vm1261 = vcmp.eq.f32.partialorder %v1260, 8.507059e+37
        %v1262 = vand.u32 %v1089, 2147483648
        %v1263 = vor.u32 1.1754944e-38, %v1262
        %v1264 = vsel %vm1261, %v1263, %v1259
        %v1265 = vmul.f32 1.0, %v1264
        %v1266 = vrcp.pop %v1090
        %v1267 = vmul.f32 %v1090, %v1266
        %v1268 = vsub.f32 1.0, %v1267
        %v1269 = vmul.f32 %v1266, %v1268
        %v1270 = vadd.f32 %v1266, %v1269
        %vm1271 = vweird.f32 %v1090
        %vm1272 = vweird.f32 %v1266
        %vm1273 = vmor %vm1271, %vm1272
        %v1274 = vsel %vm1273, %v1266, %v1270
        %v1275 = vand.u32 2147483647, %v1090
        %vm1276 = vcmp.eq.f32.partialorder %v1275, 8.507059e+37
        %v1277 = vand.u32 %v1090, 2147483648
        %v1278 = vor.u32 1.1754944e-38, %v1277
        %v1279 = vsel %vm1276, %v1278, %v1274
        %v1280 = vmul.f32 1.0, %v1279
        %v1281 = vrcp.pop %v1091
        %v1282 = vmul.f32 %v1091, %v1281
        %v1283 = vsub.f32 1.0, %v1282
        %v1284 = vmul.f32 %v1281, %v1283
        %v1285 = vadd.f32 %v1281, %v1284
        %vm1286 = vweird.f32 %v1091
        %vm1287 = vweird.f32 %v1281
        %vm1288 = vmor %vm1286, %vm1287
        %v1289 = vsel %vm1288, %v1281, %v1285
        %v1290 = vand.u32 2147483647, %v1091
        %vm1291 = vcmp.eq.f32.partialorder %v1290, 8.507059e+37
        %v1292 = vand.u32 %v1091, 2147483648
        %v1293 = vor.u32 1.1754944e-38, %v1292
        %v1294 = vsel %vm1291, %v1293, %v1289
        %v1295 = vmul.f32 1.0, %v1294
        %v1296 = vrcp.pop %v1092
        %v1297 = vmul.f32 %v1092, %v1296
        %v1298 = vsub.f32 1.0, %v1297
        %v1299 = vmul.f32 %v1296, %v1298
        %v1300 = vadd.f32 %v1296, %v1299
        %vm1301 = vweird.f32 %v1092
        %vm1302 = vweird.f32 %v1296
        %vm1303 = vmor %vm1301, %vm1302
        %v1304 = vsel %vm1303, %v1296, %v1300
        %v1305 = vand.u32 2147483647, %v1092
        %vm1306 = vcmp.eq.f32.partialorder %v1305, 8.507059e+37
        %v1307 = vand.u32 %v1092, 2147483648
        %v1308 = vor.u32 1.1754944e-38, %v1307
        %v1309 = vsel %vm1306, %v1308, %v1304
        %v1310 = vmul.f32 1.0, %v1309
        %v1311 = vrcp.pop %v1093
        %v1312 = vmul.f32 %v1093, %v1311
        %v1313 = vsub.f32 1.0, %v1312
        %v1314 = vmul.f32 %v1311, %v1313
        %v1315 = vadd.f32 %v1311, %v1314
        %vm1316 = vweird.f32 %v1093
        %vm1317 = vweird.f32 %v1311
        %vm1318 = vmor %vm1316, %vm1317
        %v1319 = vsel %vm1318, %v1311, %v1315
        %v1320 = vand.u32 2147483647, %v1093
        %vm1321 = vcmp.eq.f32.partialorder %v1320, 8.507059e+37
        %v1322 = vand.u32 %v1093, 2147483648
        %v1323 = vor.u32 1.1754944e-38, %v1322
        %v1324 = vsel %vm1321, %v1323, %v1319
        %v1325 = vmul.f32 1.0, %v1324
        %v1326 = vrcp.pop %v1094
        %v1327 = vmul.f32 %v1094, %v1326
        %v1328 = vsub.f32 1.0, %v1327
        %v1329 = vmul.f32 %v1326, %v1328
        %v1330 = vadd.f32 %v1326, %v1329
        %vm1331 = vweird.f32 %v1094
        %vm1332 = vweird.f32 %v1326
        %vm1333 = vmor %vm1331, %vm1332
        %v1334 = vsel %vm1333, %v1326, %v1330
        %v1335 = vand.u32 2147483647, %v1094
        %vm1336 = vcmp.eq.f32.partialorder %v1335, 8.507059e+37
        %v1337 = vand.u32 %v1094, 2147483648
        %v1338 = vor.u32 1.1754944e-38, %v1337
        %v1339 = vsel %vm1336, %v1338, %v1334
        %v1340 = vmul.f32 1.0, %v1339
        %v1341 = vrcp.pop %v1095
        %v1342 = vmul.f32 %v1095, %v1341
        %v1343 = vsub.f32 1.0, %v1342
        %v1344 = vmul.f32 %v1341, %v1343
        %v1345 = vadd.f32 %v1341, %v1344
        %vm1346 = vweird.f32 %v1095
        %vm1347 = vweird.f32 %v1341
        %vm1348 = vmor %vm1346, %vm1347
        %v1349 = vsel %vm1348, %v1341, %v1345
        %v1350 = vand.u32 2147483647, %v1095
        %vm1351 = vcmp.eq.f32.partialorder %v1350, 8.507059e+37
        %v1352 = vand.u32 %v1095, 2147483648
        %v1353 = vor.u32 1.1754944e-38, %v1352
        %v1354 = vsel %vm1351, %v1353, %v1349
        %v1355 = vmul.f32 1.0, %v1354
        %v1356 = vrcp.pop %v1096
        %v1357 = vmul.f32 %v1096, %v1356
        %v1358 = vsub.f32 1.0, %v1357
        %v1359 = vmul.f32 %v1356, %v1358
        %v1360 = vadd.f32 %v1356, %v1359
        %vm1361 = vweird.f32 %v1096
        %vm1362 = vweird.f32 %v1356
        %vm1363 = vmor %vm1361, %vm1362
        %v1364 = vsel %vm1363, %v1356, %v1360
        %v1365 = vand.u32 2147483647, %v1096
        %vm1366 = vcmp.eq.f32.partialorder %v1365, 8.507059e+37
        %v1367 = vand.u32 %v1096, 2147483648
        %v1368 = vor.u32 1.1754944e-38, %v1367
        %v1369 = vsel %vm1366, %v1368, %v1364
        %v1370 = vmul.f32 1.0, %v1369
        %v1371 = vrcp.pop %v1097
        %v1372 = vmul.f32 %v1097, %v1371
        %v1373 = vsub.f32 1.0, %v1372
        %v1374 = vmul.f32 %v1371, %v1373
        %v1375 = vadd.f32 %v1371, %v1374
        %vm1376 = vweird.f32 %v1097
        %vm1377 = vweird.f32 %v1371
        %vm1378 = vmor %vm1376, %vm1377
        %v1379 = vsel %vm1378, %v1371, %v1375
        %v1380 = vand.u32 2147483647, %v1097
        %vm1381 = vcmp.eq.f32.partialorder %v1380, 8.507059e+37
        %v1382 = vand.u32 %v1097, 2147483648
        %v1383 = vor.u32 1.1754944e-38, %v1382
        %v1384 = vsel %vm1381, %v1383, %v1379
        %v1385 = vmul.f32 1.0, %v1384
        %v1386 = vrcp.pop %v1098
        %v1387 = vmul.f32 %v1098, %v1386
        %v1388 = vsub.f32 1.0, %v1387
        %v1389 = vmul.f32 %v1386, %v1388
        %v1390 = vadd.f32 %v1386, %v1389
        %vm1391 = vweird.f32 %v1098
        %vm1392 = vweird.f32 %v1386
        %vm1393 = vmor %vm1391, %vm1392
        %v1394 = vsel %vm1393, %v1386, %v1390
        %v1395 = vand.u32 2147483647, %v1098
        %vm1396 = vcmp.eq.f32.partialorder %v1395, 8.507059e+37
        %v1397 = vand.u32 %v1098, 2147483648
        %v1398 = vor.u32 1.1754944e-38, %v1397
        %v1399 = vsel %vm1396, %v1398, %v1394
        %v1400 = vmul.f32 1.0, %v1399
        %v1401 = vrcp.pop %v1099
        %v1402 = vmul.f32 %v1099, %v1401
        %v1403 = vsub.f32 1.0, %v1402
        %v1404 = vmul.f32 %v1401, %v1403
        %v1405 = vadd.f32 %v1401, %v1404
        %vm1406 = vweird.f32 %v1099
        %vm1407 = vweird.f32 %v1401
        %vm1408 = vmor %vm1406, %vm1407
        %v1409 = vsel %vm1408, %v1401, %v1405
        %v1410 = vand.u32 2147483647, %v1099
        %vm1411 = vcmp.eq.f32.partialorder %v1410, 8.507059e+37
        %v1412 = vand.u32 %v1099, 2147483648
        %v1413 = vor.u32 1.1754944e-38, %v1412
        %v1414 = vsel %vm1411, %v1413, %v1409
        %v1415 = vmul.f32 1.0, %v1414
        %v1416 = vrcp.pop %v1100
        %v1417 = vmul.f32 %v1100, %v1416
        %v1418 = vsub.f32 1.0, %v1417
        %v1419 = vmul.f32 %v1416, %v1418
        %v1420 = vadd.f32 %v1416, %v1419
        %vm1421 = vweird.f32 %v1100
        %vm1422 = vweird.f32 %v1416
        %vm1423 = vmor %vm1421, %vm1422
        %v1424 = vsel %vm1423, %v1416, %v1420
        %v1425 = vand.u32 2147483647, %v1100
        %vm1426 = vcmp.eq.f32.partialorder %v1425, 8.507059e+37
        %v1427 = vand.u32 %v1100, 2147483648
        %v1428 = vor.u32 1.1754944e-38, %v1427
        %v1429 = vsel %vm1426, %v1428, %v1424
        %v1430 = vmul.f32 1.0, %v1429
        %v1431 = vrcp.pop %v1101
        %v1432 = vmul.f32 %v1101, %v1431
        %v1433 = vsub.f32 1.0, %v1432
        %v1434 = vmul.f32 %v1431, %v1433
        %v1435 = vadd.f32 %v1431, %v1434
        %vm1436 = vweird.f32 %v1101
        %vm1437 = vweird.f32 %v1431
        %vm1438 = vmor %vm1436, %vm1437
        %v1439 = vsel %vm1438, %v1431, %v1435
        %v1440 = vand.u32 2147483647, %v1101
        %vm1441 = vcmp.eq.f32.partialorder %v1440, 8.507059e+37
        %v1442 = vand.u32 %v1101, 2147483648
        %v1443 = vor.u32 1.1754944e-38, %v1442
        %v1444 = vsel %vm1441, %v1443, %v1439
        %v1445 = vmul.f32 1.0, %v1444
        %v1446 = vrcp.pop %v1102
        %v1447 = vmul.f32 %v1102, %v1446
        %v1448 = vsub.f32 1.0, %v1447
        %v1449 = vmul.f32 %v1446, %v1448
        %v1450 = vadd.f32 %v1446, %v1449
        %vm1451 = vweird.f32 %v1102
        %vm1452 = vweird.f32 %v1446
        %vm1453 = vmor %vm1451, %vm1452
        %v1454 = vsel %vm1453, %v1446, %v1450
        %v1455 = vand.u32 2147483647, %v1102
        %vm1456 = vcmp.eq.f32.partialorder %v1455, 8.507059e+37
        %v1457 = vand.u32 %v1102, 2147483648
        %v1458 = vor.u32 1.1754944e-38, %v1457
        %v1459 = vsel %vm1456, %v1458, %v1454
        %v1460 = vmul.f32 1.0, %v1459
        %v1461 = vrcp.pop %v1103
        %v1462 = vmul.f32 %v1103, %v1461
        %v1463 = vsub.f32 1.0, %v1462
        %v1464 = vmul.f32 %v1461, %v1463
        %v1465 = vadd.f32 %v1461, %v1464
        %vm1466 = vweird.f32 %v1103
        %vm1467 = vweird.f32 %v1461
        %vm1468 = vmor %vm1466, %vm1467
        %v1469 = vsel %vm1468, %v1461, %v1465
        %v1470 = vand.u32 2147483647, %v1103
        %vm1471 = vcmp.eq.f32.partialorder %v1470, 8.507059e+37
        %v1472 = vand.u32 %v1103, 2147483648
        %v1473 = vor.u32 1.1754944e-38, %v1472
        %v1474 = vsel %vm1471, %v1473, %v1469
        %v1475 = vmul.f32 1.0, %v1474
        %v1476 = vrcp.pop %v1104
        %v1477 = vmul.f32 %v1104, %v1476
        %v1478 = vsub.f32 1.0, %v1477
        %v1479 = vmul.f32 %v1476, %v1478
        %v1480 = vadd.f32 %v1476, %v1479
        %vm1481 = vweird.f32 %v1104
        %vm1482 = vweird.f32 %v1476
        %vm1483 = vmor %vm1481, %vm1482
        %v1484 = vsel %vm1483, %v1476, %v1480
        %v1485 = vand.u32 2147483647, %v1104
        %vm1486 = vcmp.eq.f32.partialorder %v1485, 8.507059e+37
        %v1487 = vand.u32 %v1104, 2147483648
        %v1488 = vor.u32 1.1754944e-38, %v1487
        %v1489 = vsel %vm1486, %v1488, %v1484
        %v1490 = vmul.f32 1.0, %v1489
        %v1491 = vrcp.pop %v1105
        %v1492 = vmul.f32 %v1105, %v1491
        %v1493 = vsub.f32 1.0, %v1492
        %v1494 = vmul.f32 %v1491, %v1493
        %v1495 = vadd.f32 %v1491, %v1494
        %vm1496 = vweird.f32 %v1105
        %vm1497 = vweird.f32 %v1491
        %vm1498 = vmor %vm1496, %vm1497
        %v1499 = vsel %vm1498, %v1491, %v1495
        %v1500 = vand.u32 2147483647, %v1105
        %vm1501 = vcmp.eq.f32.partialorder %v1500, 8.507059e+37
        %v1502 = vand.u32 %v1105, 2147483648
        %v1503 = vor.u32 1.1754944e-38, %v1502
        %v1504 = vsel %vm1501, %v1503, %v1499
        %v1505 = vmul.f32 1.0, %v1504
        %v1506 = vrcp.pop %v1106
        %v1507 = vmul.f32 %v1106, %v1506
        %v1508 = vsub.f32 1.0, %v1507
        %v1509 = vmul.f32 %v1506, %v1508
        %v1510 = vadd.f32 %v1506, %v1509
        %vm1511 = vweird.f32 %v1106
        %vm1512 = vweird.f32 %v1506
        %vm1513 = vmor %vm1511, %vm1512
        %v1514 = vsel %vm1513, %v1506, %v1510
        %v1515 = vand.u32 2147483647, %v1106
        %vm1516 = vcmp.eq.f32.partialorder %v1515, 8.507059e+37
        %v1517 = vand.u32 %v1106, 2147483648
        %v1518 = vor.u32 1.1754944e-38, %v1517
        %v1519 = vsel %vm1516, %v1518, %v1514
        %v1520 = vmul.f32 1.0, %v1519
        %v1521 = vrcp.pop %v1107
        %v1522 = vmul.f32 %v1107, %v1521
        %v1523 = vsub.f32 1.0, %v1522
        %v1524 = vmul.f32 %v1521, %v1523
        %v1525 = vadd.f32 %v1521, %v1524
        %vm1526 = vweird.f32 %v1107
        %vm1527 = vweird.f32 %v1521
        %vm1528 = vmor %vm1526, %vm1527
        %v1529 = vsel %vm1528, %v1521, %v1525
        %v1530 = vand.u32 2147483647, %v1107
        %vm1531 = vcmp.eq.f32.partialorder %v1530, 8.507059e+37
        %v1532 = vand.u32 %v1107, 2147483648
        %v1533 = vor.u32 1.1754944e-38, %v1532
        %v1534 = vsel %vm1531, %v1533, %v1529
        %v1535 = vmul.f32 1.0, %v1534
        %v1536 = vrcp.pop %v1108
        %v1537 = vmul.f32 %v1108, %v1536
        %v1538 = vsub.f32 1.0, %v1537
        %v1539 = vmul.f32 %v1536, %v1538
        %v1540 = vadd.f32 %v1536, %v1539
        %vm1541 = vweird.f32 %v1108
        %vm1542 = vweird.f32 %v1536
        %vm1543 = vmor %vm1541, %vm1542
        %v1544 = vsel %vm1543, %v1536, %v1540
        %v1545 = vand.u32 2147483647, %v1108
        %vm1546 = vcmp.eq.f32.partialorder %v1545, 8.507059e+37
        %v1547 = vand.u32 %v1108, 2147483648
        %v1548 = vor.u32 1.1754944e-38, %v1547
        %v1549 = vsel %vm1546, %v1548, %v1544
        %v1550 = vmul.f32 1.0, %v1549
        %v1551 = vrcp.pop %v1109
        %v1552 = vmul.f32 %v1109, %v1551
        %v1553 = vsub.f32 1.0, %v1552
        %v1554 = vmul.f32 %v1551, %v1553
        %v1555 = vadd.f32 %v1551, %v1554
        %vm1556 = vweird.f32 %v1109
        %vm1557 = vweird.f32 %v1551
        %vm1558 = vmor %vm1556, %vm1557
        %v1559 = vsel %vm1558, %v1551, %v1555
        %v1560 = vand.u32 2147483647, %v1109
        %vm1561 = vcmp.eq.f32.partialorder %v1560, 8.507059e+37
        %v1562 = vand.u32 %v1109, 2147483648
        %v1563 = vor.u32 1.1754944e-38, %v1562
        %v1564 = vsel %vm1561, %v1563, %v1559
        %v1565 = vmul.f32 1.0, %v1564
        %v1566 = vrcp.pop %v1110
        %v1567 = vmul.f32 %v1110, %v1566
        %v1568 = vsub.f32 1.0, %v1567
        %v1569 = vmul.f32 %v1566, %v1568
        %v1570 = vadd.f32 %v1566, %v1569
        %vm1571 = vweird.f32 %v1110
        %vm1572 = vweird.f32 %v1566
        %vm1573 = vmor %vm1571, %vm1572
        %v1574 = vsel %vm1573, %v1566, %v1570
        %v1575 = vand.u32 2147483647, %v1110
        %vm1576 = vcmp.eq.f32.partialorder %v1575, 8.507059e+37
        %v1577 = vand.u32 %v1110, 2147483648
        %v1578 = vor.u32 1.1754944e-38, %v1577
        %v1579 = vsel %vm1576, %v1578, %v1574
        %v1580 = vmul.f32 1.0, %v1579
        %v1581 = vrcp.pop %v1111
        %v1582 = vmul.f32 %v1111, %v1581
        %v1583 = vsub.f32 1.0, %v1582
        %v1584 = vmul.f32 %v1581, %v1583
        %v1585 = vadd.f32 %v1581, %v1584
        %vm1586 = vweird.f32 %v1111
        %vm1587 = vweird.f32 %v1581
        %vm1588 = vmor %vm1586, %vm1587
        %v1589 = vsel %vm1588, %v1581, %v1585
        %v1590 = vand.u32 2147483647, %v1111
        %vm1591 = vcmp.eq.f32.partialorder %v1590, 8.507059e+37
        %v1592 = vand.u32 %v1111, 2147483648
        %v1593 = vor.u32 1.1754944e-38, %v1592
        %v1594 = vsel %vm1591, %v1593, %v1589
        %v1595 = vmul.f32 1.0, %v1594
        %v1596 = vrcp.pop %v1112
        %v1597 = vmul.f32 %v1112, %v1596
        %v1598 = vsub.f32 1.0, %v1597
        %v1599 = vmul.f32 %v1596, %v1598
        %v1600 = vadd.f32 %v1596, %v1599
        %vm1601 = vweird.f32 %v1112
        %vm1602 = vweird.f32 %v1596
        %vm1603 = vmor %vm1601, %vm1602
        %v1604 = vsel %vm1603, %v1596, %v1600
        %v1605 = vand.u32 2147483647, %v1112
        %vm1606 = vcmp.eq.f32.partialorder %v1605, 8.507059e+37
        %v1607 = vand.u32 %v1112, 2147483648
        %v1608 = vor.u32 1.1754944e-38, %v1607
        %v1609 = vsel %vm1606, %v1608, %v1604
        %v1610 = vmul.f32 1.0, %v1609
        %v1611 = vrcp.pop %v1113
        %v1612 = vmul.f32 %v1113, %v1611
        %v1613 = vsub.f32 1.0, %v1612
        %v1614 = vmul.f32 %v1611, %v1613
        %v1615 = vadd.f32 %v1611, %v1614
        %vm1616 = vweird.f32 %v1113
        %vm1617 = vweird.f32 %v1611
        %vm1618 = vmor %vm1616, %vm1617
        %v1619 = vsel %vm1618, %v1611, %v1615
        %v1620 = vand.u32 2147483647, %v1113
        %vm1621 = vcmp.eq.f32.partialorder %v1620, 8.507059e+37
        %v1622 = vand.u32 %v1113, 2147483648
        %v1623 = vor.u32 1.1754944e-38, %v1622
        %v1624 = vsel %vm1621, %v1623, %v1619
        %v1625 = vmul.f32 1.0, %v1624
        %v1626 = vrcp.pop %v1114
        %v1627 = vmul.f32 %v1114, %v1626
        %v1628 = vsub.f32 1.0, %v1627
        %v1629 = vmul.f32 %v1626, %v1628
        %v1630 = vadd.f32 %v1626, %v1629
        %vm1631 = vweird.f32 %v1114
        %vm1632 = vweird.f32 %v1626
        %vm1633 = vmor %vm1631, %vm1632
        %v1634 = vsel %vm1633, %v1626, %v1630
        %v1635 = vand.u32 2147483647, %v1114
        %vm1636 = vcmp.eq.f32.partialorder %v1635, 8.507059e+37
        %v1637 = vand.u32 %v1114, 2147483648
        %v1638 = vor.u32 1.1754944e-38, %v1637
        %v1639 = vsel %vm1636, %v1638, %v1634
        %v1640 = vmul.f32 1.0, %v1639
        %v1641 = vrcp.pop %v1115
        %v1642 = vmul.f32 %v1115, %v1641
        %v1643 = vsub.f32 1.0, %v1642
        %v1644 = vmul.f32 %v1641, %v1643
        %v1645 = vadd.f32 %v1641, %v1644
        %vm1646 = vweird.f32 %v1115
        %vm1647 = vweird.f32 %v1641
        %vm1648 = vmor %vm1646, %vm1647
        %v1649 = vsel %vm1648, %v1641, %v1645
        %v1650 = vand.u32 2147483647, %v1115
        %vm1651 = vcmp.eq.f32.partialorder %v1650, 8.507059e+37
        %v1652 = vand.u32 %v1115, 2147483648
        %v1653 = vor.u32 1.1754944e-38, %v1652
        %v1654 = vsel %vm1651, %v1653, %v1649
        %v1655 = vmul.f32 1.0, %v1654
        %v1656 = vrcp.pop %v1116
        %v1657 = vmul.f32 %v1116, %v1656
        %v1658 = vsub.f32 1.0, %v1657
        %v1659 = vmul.f32 %v1656, %v1658
        %v1660 = vadd.f32 %v1656, %v1659
        %vm1661 = vweird.f32 %v1116
        %vm1662 = vweird.f32 %v1656
        %vm1663 = vmor %vm1661, %vm1662
        %v1664 = vsel %vm1663, %v1656, %v1660
        %v1665 = vand.u32 2147483647, %v1116
        %vm1666 = vcmp.eq.f32.partialorder %v1665, 8.507059e+37
        %v1667 = vand.u32 %v1116, 2147483648
        %v1668 = vor.u32 1.1754944e-38, %v1667
        %v1669 = vsel %vm1666, %v1668, %v1664
        %v1670 = vmul.f32 1.0, %v1669
        %v1671 = vrcp.pop %v1117
        %v1672 = vmul.f32 %v1117, %v1671
        %v1673 = vsub.f32 1.0, %v1672
        %v1674 = vmul.f32 %v1671, %v1673
        %v1675 = vadd.f32 %v1671, %v1674
        %vm1676 = vweird.f32 %v1117
        %vm1677 = vweird.f32 %v1671
        %vm1678 = vmor %vm1676, %vm1677
        %v1679 = vsel %vm1678, %v1671, %v1675
        %v1680 = vand.u32 2147483647, %v1117
        %vm1681 = vcmp.eq.f32.partialorder %v1680, 8.507059e+37
        %v1682 = vand.u32 %v1117, 2147483648
        %v1683 = vor.u32 1.1754944e-38, %v1682
        %v1684 = vsel %vm1681, %v1683, %v1679
        %v1685 = vmul.f32 1.0, %v1684
        %v1686 = vrcp.pop %v1118
        %v1687 = vmul.f32 %v1118, %v1686
        %v1688 = vsub.f32 1.0, %v1687
        %v1689 = vmul.f32 %v1686, %v1688
        %v1690 = vadd.f32 %v1686, %v1689
        %vm1691 = vweird.f32 %v1118
        %vm1692 = vweird.f32 %v1686
        %vm1693 = vmor %vm1691, %vm1692
        %v1694 = vsel %vm1693, %v1686, %v1690
        %v1695 = vand.u32 2147483647, %v1118
        %vm1696 = vcmp.eq.f32.partialorder %v1695, 8.507059e+37
        %v1697 = vand.u32 %v1118, 2147483648
        %v1698 = vor.u32 1.1754944e-38, %v1697
        %v1699 = vsel %vm1696, %v1698, %v1694
        %v1700 = vmul.f32 1.0, %v1699
        %v1701 = vrcp.pop %v1119
        %v1702 = vmul.f32 %v1119, %v1701
        %v1703 = vsub.f32 1.0, %v1702
        %v1704 = vmul.f32 %v1701, %v1703
        %v1705 = vadd.f32 %v1701, %v1704
        %vm1706 = vweird.f32 %v1119
        %vm1707 = vweird.f32 %v1701
        %vm1708 = vmor %vm1706, %vm1707
        %v1709 = vsel %vm1708, %v1701, %v1705
        %v1710 = vand.u32 2147483647, %v1119
        %vm1711 = vcmp.eq.f32.partialorder %v1710, 8.507059e+37
        %v1712 = vand.u32 %v1119, 2147483648
        %v1713 = vor.u32 1.1754944e-38, %v1712
        %v1714 = vsel %vm1711, %v1713, %v1709
        %v1715 = vmul.f32 1.0, %v1714
        %v1716 = vrcp.pop %v1120
        %v1717 = vmul.f32 %v1120, %v1716
        %v1718 = vsub.f32 1.0, %v1717
        %v1719 = vmul.f32 %v1716, %v1718
        %v1720 = vadd.f32 %v1716, %v1719
        %vm1721 = vweird.f32 %v1120
        %vm1722 = vweird.f32 %v1716
        %vm1723 = vmor %vm1721, %vm1722
        %v1724 = vsel %vm1723, %v1716, %v1720
        %v1725 = vand.u32 2147483647, %v1120
        %vm1726 = vcmp.eq.f32.partialorder %v1725, 8.507059e+37
        %v1727 = vand.u32 %v1120, 2147483648
        %v1728 = vor.u32 1.1754944e-38, %v1727
        %v1729 = vsel %vm1726, %v1728, %v1724
        %v1730 = vmul.f32 1.0, %v1729
        %v1731 = vrcp.pop %v1121
        %v1732 = vmul.f32 %v1121, %v1731
        %v1733 = vsub.f32 1.0, %v1732
        %v1734 = vmul.f32 %v1731, %v1733
        %v1735 = vadd.f32 %v1731, %v1734
        %vm1736 = vweird.f32 %v1121
        %vm1737 = vweird.f32 %v1731
        %vm1738 = vmor %vm1736, %vm1737
        %v1739 = vsel %vm1738, %v1731, %v1735
        %v1740 = vand.u32 2147483647, %v1121
        %vm1741 = vcmp.eq.f32.partialorder %v1740, 8.507059e+37
        %v1742 = vand.u32 %v1121, 2147483648
        %v1743 = vor.u32 1.1754944e-38, %v1742
        %v1744 = vsel %vm1741, %v1743, %v1739
        %v1745 = vmul.f32 1.0, %v1744
        %v1746 = vrcp.pop %v1122
        %v1747 = vmul.f32 %v1122, %v1746
        %v1748 = vsub.f32 1.0, %v1747
        %v1749 = vmul.f32 %v1746, %v1748
        %v1750 = vadd.f32 %v1746, %v1749
        %vm1751 = vweird.f32 %v1122
        %vm1752 = vweird.f32 %v1746
        %vm1753 = vmor %vm1751, %vm1752
        %v1754 = vsel %vm1753, %v1746, %v1750
        %v1755 = vand.u32 2147483647, %v1122
        %vm1756 = vcmp.eq.f32.partialorder %v1755, 8.507059e+37
        %v1757 = vand.u32 %v1122, 2147483648
        %v1758 = vor.u32 1.1754944e-38, %v1757
        %v1759 = vsel %vm1756, %v1758, %v1754
        %v1760 = vmul.f32 1.0, %v1759
        %v1761 = vrcp.pop %v1123
        %v1762 = vmul.f32 %v1123, %v1761
        %v1763 = vsub.f32 1.0, %v1762
        %v1764 = vmul.f32 %v1761, %v1763
        %v1765 = vadd.f32 %v1761, %v1764
        %vm1766 = vweird.f32 %v1123
        %vm1767 = vweird.f32 %v1761
        %vm1768 = vmor %vm1766, %vm1767
        %v1769 = vsel %vm1768, %v1761, %v1765
        %v1770 = vand.u32 2147483647, %v1123
        %vm1771 = vcmp.eq.f32.partialorder %v1770, 8.507059e+37
        %v1772 = vand.u32 %v1123, 2147483648
        %v1773 = vor.u32 1.1754944e-38, %v1772
        %v1774 = vsel %vm1771, %v1773, %v1769
        %v1775 = vmul.f32 1.0, %v1774
        %v1776 = vrcp.pop %v1124
        %v1777 = vmul.f32 %v1124, %v1776
        %v1778 = vsub.f32 1.0, %v1777
        %v1779 = vmul.f32 %v1776, %v1778
        %v1780 = vadd.f32 %v1776, %v1779
        %vm1781 = vweird.f32 %v1124
        %vm1782 = vweird.f32 %v1776
        %vm1783 = vmor %vm1781, %vm1782
        %v1784 = vsel %vm1783, %v1776, %v1780
        %v1785 = vand.u32 2147483647, %v1124
        %vm1786 = vcmp.eq.f32.partialorder %v1785, 8.507059e+37
        %v1787 = vand.u32 %v1124, 2147483648
        %v1788 = vor.u32 1.1754944e-38, %v1787
        %v1789 = vsel %vm1786, %v1788, %v1784
        %v1790 = vmul.f32 1.0, %v1789
        %v1791 = vrcp.pop %v1125
        %v1792 = vmul.f32 %v1125, %v1791
        %v1793 = vsub.f32 1.0, %v1792
        %v1794 = vmul.f32 %v1791, %v1793
        %v1795 = vadd.f32 %v1791, %v1794
        %vm1796 = vweird.f32 %v1125
        %vm1797 = vweird.f32 %v1791
        %vm1798 = vmor %vm1796, %vm1797
        %v1799 = vsel %vm1798, %v1791, %v1795
        %v1800 = vand.u32 2147483647, %v1125
        %vm1801 = vcmp.eq.f32.partialorder %v1800, 8.507059e+37
        %v1802 = vand.u32 %v1125, 2147483648
        %v1803 = vor.u32 1.1754944e-38, %v1802
        %v1804 = vsel %vm1801, %v1803, %v1799
        %v1805 = vmul.f32 1.0, %v1804
        %v1806 = vrcp.pop %v1126
        %v1807 = vmul.f32 %v1126, %v1806
        %v1808 = vsub.f32 1.0, %v1807
        %v1809 = vmul.f32 %v1806, %v1808
        %v1810 = vadd.f32 %v1806, %v1809
        %vm1811 = vweird.f32 %v1126
        %vm1812 = vweird.f32 %v1806
        %vm1813 = vmor %vm1811, %vm1812
        %v1814 = vsel %vm1813, %v1806, %v1810
        %v1815 = vand.u32 2147483647, %v1126
        %vm1816 = vcmp.eq.f32.partialorder %v1815, 8.507059e+37
        %v1817 = vand.u32 %v1126, 2147483648
        %v1818 = vor.u32 1.1754944e-38, %v1817
        %v1819 = vsel %vm1816, %v1818, %v1814
        %v1820 = vmul.f32 1.0, %v1819
        %v1821 = vrcp.pop %v1127
        %v1822 = vmul.f32 %v1127, %v1821
        %v1823 = vsub.f32 1.0, %v1822
        %v1824 = vmul.f32 %v1821, %v1823
        %v1825 = vadd.f32 %v1821, %v1824
        %vm1826 = vweird.f32 %v1127
        %vm1827 = vweird.f32 %v1821
        %vm1828 = vmor %vm1826, %vm1827
        %v1829 = vsel %vm1828, %v1821, %v1825
        %v1830 = vand.u32 2147483647, %v1127
        %vm1831 = vcmp.eq.f32.partialorder %v1830, 8.507059e+37
        %v1832 = vand.u32 %v1127, 2147483648
        %v1833 = vor.u32 1.1754944e-38, %v1832
        %v1834 = vsel %vm1831, %v1833, %v1829
        %v1835 = vmul.f32 1.0, %v1834
        %v1836 = vrcp.pop %v1128
        %v1837 = vmul.f32 %v1128, %v1836
        %v1838 = vsub.f32 1.0, %v1837
        %v1839 = vmul.f32 %v1836, %v1838
        %v1840 = vadd.f32 %v1836, %v1839
        %vm1841 = vweird.f32 %v1128
        %vm1842 = vweird.f32 %v1836
        %vm1843 = vmor %vm1841, %vm1842
        %v1844 = vsel %vm1843, %v1836, %v1840
        %v1845 = vand.u32 2147483647, %v1128
        %vm1846 = vcmp.eq.f32.partialorder %v1845, 8.507059e+37
        %v1847 = vand.u32 %v1128, 2147483648
        %v1848 = vor.u32 1.1754944e-38, %v1847
        %v1849 = vsel %vm1846, %v1848, %v1844
        %v1850 = vmul.f32 1.0, %v1849
        %v1851 = vrcp.pop %v1129
        %v1852 = vmul.f32 %v1129, %v1851
        %v1853 = vsub.f32 1.0, %v1852
        %v1854 = vmul.f32 %v1851, %v1853
        %v1855 = vadd.f32 %v1851, %v1854
        %vm1856 = vweird.f32 %v1129
        %vm1857 = vweird.f32 %v1851
        %vm1858 = vmor %vm1856, %vm1857
        %v1859 = vsel %vm1858, %v1851, %v1855
        %v1860 = vand.u32 2147483647, %v1129
        %vm1861 = vcmp.eq.f32.partialorder %v1860, 8.507059e+37
        %v1862 = vand.u32 %v1129, 2147483648
        %v1863 = vor.u32 1.1754944e-38, %v1862
        %v1864 = vsel %vm1861, %v1863, %v1859
        %v1865 = vmul.f32 1.0, %v1864
        %v1866 = vrcp.pop %v1130
        %v1867 = vmul.f32 %v1130, %v1866
        %v1868 = vsub.f32 1.0, %v1867
        %v1869 = vmul.f32 %v1866, %v1868
        %v1870 = vadd.f32 %v1866, %v1869
        %vm1871 = vweird.f32 %v1130
        %vm1872 = vweird.f32 %v1866
        %vm1873 = vmor %vm1871, %vm1872
        %v1874 = vsel %vm1873, %v1866, %v1870
        %v1875 = vand.u32 2147483647, %v1130
        %vm1876 = vcmp.eq.f32.partialorder %v1875, 8.507059e+37
        %v1877 = vand.u32 %v1130, 2147483648
        %v1878 = vor.u32 1.1754944e-38, %v1877
        %v1879 = vsel %vm1876, %v1878, %v1874
        %v1880 = vmul.f32 1.0, %v1879
        %v1881 = vrcp.pop %v1131
        %v1882 = vmul.f32 %v1131, %v1881
        %v1883 = vsub.f32 1.0, %v1882
        %v1884 = vmul.f32 %v1881, %v1883
        %v1885 = vadd.f32 %v1881, %v1884
        %vm1886 = vweird.f32 %v1131
        %vm1887 = vweird.f32 %v1881
        %vm1888 = vmor %vm1886, %vm1887
        %v1889 = vsel %vm1888, %v1881, %v1885
        %v1890 = vand.u32 2147483647, %v1131
        %vm1891 = vcmp.eq.f32.partialorder %v1890, 8.507059e+37
        %v1892 = vand.u32 %v1131, 2147483648
        %v1893 = vor.u32 1.1754944e-38, %v1892
        %v1894 = vsel %vm1891, %v1893, %v1889
        %v1895 = vmul.f32 1.0, %v1894
        %v1896 = vrcp.pop %v1132
        %v1897 = vmul.f32 %v1132, %v1896
        %v1898 = vsub.f32 1.0, %v1897
        %v1899 = vmul.f32 %v1896, %v1898
        %v1900 = vadd.f32 %v1896, %v1899
        %vm1901 = vweird.f32 %v1132
        %vm1902 = vweird.f32 %v1896
        %vm1903 = vmor %vm1901, %vm1902
        %v1904 = vsel %vm1903, %v1896, %v1900
        %v1905 = vand.u32 2147483647, %v1132
        %vm1906 = vcmp.eq.f32.partialorder %v1905, 8.507059e+37
        %v1907 = vand.u32 %v1132, 2147483648
        %v1908 = vor.u32 1.1754944e-38, %v1907
        %v1909 = vsel %vm1906, %v1908, %v1904
        %v1910 = vmul.f32 1.0, %v1909
        %v1911 = vrcp.pop %v1133
        %v1912 = vmul.f32 %v1133, %v1911
        %v1913 = vsub.f32 1.0, %v1912
        %v1914 = vmul.f32 %v1911, %v1913
        %v1915 = vadd.f32 %v1911, %v1914
        %vm1916 = vweird.f32 %v1133
        %vm1917 = vweird.f32 %v1911
        %vm1918 = vmor %vm1916, %vm1917
        %v1919 = vsel %vm1918, %v1911, %v1915
        %v1920 = vand.u32 2147483647, %v1133
        %vm1921 = vcmp.eq.f32.partialorder %v1920, 8.507059e+37
        %v1922 = vand.u32 %v1133, 2147483648
        %v1923 = vor.u32 1.1754944e-38, %v1922
        %v1924 = vsel %vm1921, %v1923, %v1919
        %v1925 = vmul.f32 1.0, %v1924
        %v1926 = vrcp.pop %v1134
        %v1927 = vmul.f32 %v1134, %v1926
        %v1928 = vsub.f32 1.0, %v1927
        %v1929 = vmul.f32 %v1926, %v1928
        %v1930 = vadd.f32 %v1926, %v1929
        %vm1931 = vweird.f32 %v1134
        %vm1932 = vweird.f32 %v1926
        %vm1933 = vmor %vm1931, %vm1932
        %v1934 = vsel %vm1933, %v1926, %v1930
        %v1935 = vand.u32 2147483647, %v1134
        %vm1936 = vcmp.eq.f32.partialorder %v1935, 8.507059e+37
        %v1937 = vand.u32 %v1134, 2147483648
        %v1938 = vor.u32 1.1754944e-38, %v1937
        %v1939 = vsel %vm1936, %v1938, %v1934
        %v1940 = vmul.f32 1.0, %v1939
        %v1941 = vrcp.pop %v1135
        %v1942 = vmul.f32 %v1135, %v1941
        %v1943 = vsub.f32 1.0, %v1942
        %v1944 = vmul.f32 %v1941, %v1943
        %v1945 = vadd.f32 %v1941, %v1944
        %vm1946 = vweird.f32 %v1135
        %vm1947 = vweird.f32 %v1941
        %vm1948 = vmor %vm1946, %vm1947
        %v1949 = vsel %vm1948, %v1941, %v1945
        %v1950 = vand.u32 2147483647, %v1135
        %vm1951 = vcmp.eq.f32.partialorder %v1950, 8.507059e+37
        %v1952 = vand.u32 %v1135, 2147483648
        %v1953 = vor.u32 1.1754944e-38, %v1952
        %v1954 = vsel %vm1951, %v1953, %v1949
        %v1955 = vmul.f32 1.0, %v1954
        %v1956 = vrcp.pop %v1136
        %v1957 = vmul.f32 %v1136, %v1956
        %v1958 = vsub.f32 1.0, %v1957
        %v1959 = vmul.f32 %v1956, %v1958
        %v1960 = vadd.f32 %v1956, %v1959
        %vm1961 = vweird.f32 %v1136
        %vm1962 = vweird.f32 %v1956
        %vm1963 = vmor %vm1961, %vm1962
        %v1964 = vsel %vm1963, %v1956, %v1960
        %v1965 = vand.u32 2147483647, %v1136
        %vm1966 = vcmp.eq.f32.partialorder %v1965, 8.507059e+37
        %v1967 = vand.u32 %v1136, 2147483648
        %v1968 = vor.u32 1.1754944e-38, %v1967
        %v1969 = vsel %vm1966, %v1968, %v1964
        %v1970 = vmul.f32 1.0, %v1969
        %v1971 = vrcp.pop %v1137
        %v1972 = vmul.f32 %v1137, %v1971
        %v1973 = vsub.f32 1.0, %v1972
        %v1974 = vmul.f32 %v1971, %v1973
        %v1975 = vadd.f32 %v1971, %v1974
        %vm1976 = vweird.f32 %v1137
        %vm1977 = vweird.f32 %v1971
        %vm1978 = vmor %vm1976, %vm1977
        %v1979 = vsel %vm1978, %v1971, %v1975
        %v1980 = vand.u32 2147483647, %v1137
        %vm1981 = vcmp.eq.f32.partialorder %v1980, 8.507059e+37
        %v1982 = vand.u32 %v1137, 2147483648
        %v1983 = vor.u32 1.1754944e-38, %v1982
        %v1984 = vsel %vm1981, %v1983, %v1979
        %v1985 = vmul.f32 1.0, %v1984
        %v1986 = vrcp.pop %v1138
        %v1987 = vmul.f32 %v1138, %v1986
        %v1988 = vsub.f32 1.0, %v1987
        %v1989 = vmul.f32 %v1986, %v1988
        %v1990 = vadd.f32 %v1986, %v1989
        %vm1991 = vweird.f32 %v1138
        %vm1992 = vweird.f32 %v1986
        %vm1993 = vmor %vm1991, %vm1992
        %v1994 = vsel %vm1993, %v1986, %v1990
        %v1995 = vand.u32 2147483647, %v1138
        %vm1996 = vcmp.eq.f32.partialorder %v1995, 8.507059e+37
        %v1997 = vand.u32 %v1138, 2147483648
        %v1998 = vor.u32 1.1754944e-38, %v1997
        %v1999 = vsel %vm1996, %v1998, %v1994
        %v2000 = vmul.f32 1.0, %v1999
        %v2001 = vrcp.pop %v1139
        %v2002 = vmul.f32 %v1139, %v2001
        %v2003 = vsub.f32 1.0, %v2002
        %v2004 = vmul.f32 %v2001, %v2003
        %v2005 = vadd.f32 %v2001, %v2004
        %vm2006 = vweird.f32 %v1139
        %vm2007 = vweird.f32 %v2001
        %vm2008 = vmor %vm2006, %vm2007
        %v2009 = vsel %vm2008, %v2001, %v2005
        %v2010 = vand.u32 2147483647, %v1139
        %vm2011 = vcmp.eq.f32.partialorder %v2010, 8.507059e+37
        %v2012 = vand.u32 %v1139, 2147483648
        %v2013 = vor.u32 1.1754944e-38, %v2012
        %v2014 = vsel %vm2011, %v2013, %v2009
        %v2015 = vmul.f32 1.0, %v2014
        %v2016 = vrcp.pop %v1140
        %v2017 = vmul.f32 %v1140, %v2016
        %v2018 = vsub.f32 1.0, %v2017
        %v2019 = vmul.f32 %v2016, %v2018
        %v2020 = vadd.f32 %v2016, %v2019
        %vm2021 = vweird.f32 %v1140
        %vm2022 = vweird.f32 %v2016
        %vm2023 = vmor %vm2021, %vm2022
        %v2024 = vsel %vm2023, %v2016, %v2020
        %v2025 = vand.u32 2147483647, %v1140
        %vm2026 = vcmp.eq.f32.partialorder %v2025, 8.507059e+37
        %v2027 = vand.u32 %v1140, 2147483648
        %v2028 = vor.u32 1.1754944e-38, %v2027
        %v2029 = vsel %vm2026, %v2028, %v2024
        %v2030 = vmul.f32 1.0, %v2029
        %v2031 = vrcp.pop %v1141
        %v2032 = vmul.f32 %v1141, %v2031
        %v2033 = vsub.f32 1.0, %v2032
        %v2034 = vmul.f32 %v2031, %v2033
        %v2035 = vadd.f32 %v2031, %v2034
        %vm2036 = vweird.f32 %v1141
        %vm2037 = vweird.f32 %v2031
        %vm2038 = vmor %vm2036, %vm2037
        %v2039 = vsel %vm2038, %v2031, %v2035
        %v2040 = vand.u32 2147483647, %v1141
        %vm2041 = vcmp.eq.f32.partialorder %v2040, 8.507059e+37
        %v2042 = vand.u32 %v1141, 2147483648
        %v2043 = vor.u32 1.1754944e-38, %v2042
        %v2044 = vsel %vm2041, %v2043, %v2039
        %v2045 = vmul.f32 1.0, %v2044
        %v2046 = vrcp.pop %v1142
        %v2047 = vmul.f32 %v1142, %v2046
        %v2048 = vsub.f32 1.0, %v2047
        %v2049 = vmul.f32 %v2046, %v2048
        %v2050 = vadd.f32 %v2046, %v2049
        %vm2051 = vweird.f32 %v1142
        %vm2052 = vweird.f32 %v2046
        %vm2053 = vmor %vm2051, %vm2052
        %v2054 = vsel %vm2053, %v2046, %v2050
        %v2055 = vand.u32 2147483647, %v1142
        %vm2056 = vcmp.eq.f32.partialorder %v2055, 8.507059e+37
        %v2057 = vand.u32 %v1142, 2147483648
        %v2058 = vor.u32 1.1754944e-38, %v2057
        %v2059 = vsel %vm2056, %v2058, %v2054
        %v2060 = vmul.f32 1.0, %v2059
        %v2061 = vrcp.pop %v1143
        %v2062 = vmul.f32 %v1143, %v2061
        %v2063 = vsub.f32 1.0, %v2062
        %v2064 = vmul.f32 %v2061, %v2063
        %v2065 = vadd.f32 %v2061, %v2064
        %vm2066 = vweird.f32 %v1143
        %vm2067 = vweird.f32 %v2061
        %vm2068 = vmor %vm2066, %vm2067
        %v2069 = vsel %vm2068, %v2061, %v2065
        %v2070 = vand.u32 2147483647, %v1143
        %vm2071 = vcmp.eq.f32.partialorder %v2070, 8.507059e+37
        %v2072 = vand.u32 %v1143, 2147483648
        %v2073 = vor.u32 1.1754944e-38, %v2072
        %v2074 = vsel %vm2071, %v2073, %v2069
        %v2075 = vmul.f32 1.0, %v2074
        %v2076 = vrcp.pop %v1144
        %v2077 = vmul.f32 %v1144, %v2076
        %v2078 = vsub.f32 1.0, %v2077
        %v2079 = vmul.f32 %v2076, %v2078
        %v2080 = vadd.f32 %v2076, %v2079
        %vm2081 = vweird.f32 %v1144
        %vm2082 = vweird.f32 %v2076
        %vm2083 = vmor %vm2081, %vm2082
        %v2084 = vsel %vm2083, %v2076, %v2080
        %v2085 = vand.u32 2147483647, %v1144
        %vm2086 = vcmp.eq.f32.partialorder %v2085, 8.507059e+37
        %v2087 = vand.u32 %v1144, 2147483648
        %v2088 = vor.u32 1.1754944e-38, %v2087
        %v2089 = vsel %vm2086, %v2088, %v2084
        %v2090 = vmul.f32 1.0, %v2089
        %v2091 = vrcp.pop %v1145
        %v2092 = vmul.f32 %v1145, %v2091
        %v2093 = vsub.f32 1.0, %v2092
        %v2094 = vmul.f32 %v2091, %v2093
        %v2095 = vadd.f32 %v2091, %v2094
        %vm2096 = vweird.f32 %v1145
        %vm2097 = vweird.f32 %v2091
        %vm2098 = vmor %vm2096, %vm2097
        %v2099 = vsel %vm2098, %v2091, %v2095
        %v2100 = vand.u32 2147483647, %v1145
        %vm2101 = vcmp.eq.f32.partialorder %v2100, 8.507059e+37
        %v2102 = vand.u32 %v1145, 2147483648
        %v2103 = vor.u32 1.1754944e-38, %v2102
        %v2104 = vsel %vm2101, %v2103, %v2099
        %v2105 = vmul.f32 1.0, %v2104
        %vm2106 = vcmask 130048
        %v2107 = vsel %vm2106, %v1160, 0.0
        %v2108 = vsel %vm2106, %v1190, 0.0
        %v2109 = vadd.f32 %v2107, %v2108
        %v2110 = vsel %vm2106, %v1220, 0.0
        %v2111 = vadd.f32 %v2109, %v2110
        %v2112 = vsel %vm2106, %v1250, 0.0
        %v2113 = vadd.f32 %v2111, %v2112
        %v2114 = vsel %vm2106, %v1175, 0.0
        %v2115 = vsel %vm2106, %v1205, 0.0
        %v2116 = vadd.f32 %v2114, %v2115
        %v2117 = vsel %vm2106, %v1235, 0.0
        %v2118 = vadd.f32 %v2116, %v2117
        %v2119 = vsel %vm2106, %v1265, 0.0
        %v2120 = vadd.f32 %v2118, %v2119
        %v2121 = vsel %vm2106, %v1280, 0.0
        %v2122 = vsel %vm2106, %v1310, 0.0
        %v2123 = vadd.f32 %v2121, %v2122
        %v2124 = vsel %vm2106, %v1340, 0.0
        %v2125 = vadd.f32 %v2123, %v2124
        %v2126 = vsel %vm2106, %v1370, 0.0
        %v2127 = vadd.f32 %v2125, %v2126
        %v2128 = vsel %vm2106, %v1295, 0.0
        %v2129 = vsel %vm2106, %v1325, 0.0
        %v2130 = vadd.f32 %v2128, %v2129
        %v2131 = vsel %vm2106, %v1355, 0.0
        %v2132 = vadd.f32 %v2130, %v2131
        %v2133 = vsel %vm2106, %v1385, 0.0
        %v2134 = vadd.f32 %v2132, %v2133
        %v2135 = vsel %vm2106, %v1400, 0.0
        %v2136 = vsel %vm2106, %v1430, 0.0
        %v2137 = vadd.f32 %v2135, %v2136
        %v2138 = vsel %vm2106, %v1460, 0.0
        %v2139 = vadd.f32 %v2137, %v2138
        %v2140 = vsel %vm2106, %v1490, 0.0
        %v2141 = vadd.f32 %v2139, %v2140
        %v2142 = vsel %vm2106, %v1415, 0.0
        %v2143 = vsel %vm2106, %v1445, 0.0
        %v2144 = vadd.f32 %v2142, %v2143
        %v2145 = vsel %vm2106, %v1475, 0.0
        %v2146 = vadd.f32 %v2144, %v2145
        %v2147 = vsel %vm2106, %v1505, 0.0
        %v2148 = vadd.f32 %v2146, %v2147
        %v2149 = vsel %vm2106, %v1520, 0.0
        %v2150 = vsel %vm2106, %v1550, 0.0
        %v2151 = vadd.f32 %v2149, %v2150
        %v2152 = vsel %vm2106, %v1580, 0.0
        %v2153 = vadd.f32 %v2151, %v2152
        %v2154 = vsel %vm2106, %v1610, 0.0
        %v2155 = vadd.f32 %v2153, %v2154
        %v2156 = vsel %vm2106, %v1535, 0.0
        %v2157 = vsel %vm2106, %v1565, 0.0
        %v2158 = vadd.f32 %v2156, %v2157
        %v2159 = vsel %vm2106, %v1595, 0.0
        %v2160 = vadd.f32 %v2158, %v2159
        %v2161 = vsel %vm2106, %v1625, 0.0
        %v2162 = vadd.f32 %v2160, %v2161
        %v2163 = vsel %vm2106, %v1640, 0.0
        %v2164 = vsel %vm2106, %v1670, 0.0
        %v2165 = vadd.f32 %v2163, %v2164
        %v2166 = vsel %vm2106, %v1700, 0.0
        %v2167 = vadd.f32 %v2165, %v2166
        %v2168 = vsel %vm2106, %v1730, 0.0
        %v2169 = vadd.f32 %v2167, %v2168
        %v2170 = vsel %vm2106, %v1655, 0.0
        %v2171 = vsel %vm2106, %v1685, 0.0
        %v2172 = vadd.f32 %v2170, %v2171
        %v2173 = vsel %vm2106, %v1715, 0.0
        %v2174 = vadd.f32 %v2172, %v2173
        %v2175 = vsel %vm2106, %v1745, 0.0
        %v2176 = vadd.f32 %v2174, %v2175
        %v2177 = vsel %vm2106, %v1760, 0.0
        %v2178 = vsel %vm2106, %v1790, 0.0
        %v2179 = vadd.f32 %v2177, %v2178
        %v2180 = vsel %vm2106, %v1820, 0.0
        %v2181 = vadd.f32 %v2179, %v2180
        %v2182 = vsel %vm2106, %v1850, 0.0
        %v2183 = vadd.f32 %v2181, %v2182
        %v2184 = vsel %vm2106, %v1775, 0.0
        %v2185 = vsel %vm2106, %v1805, 0.0
        %v2186 = vadd.f32 %v2184, %v2185
        %v2187 = vsel %vm2106, %v1835, 0.0
        %v2188 = vadd.f32 %v2186, %v2187
        %v2189 = vsel %vm2106, %v1865, 0.0
        %v2190 = vadd.f32 %v2188, %v2189
        %v2191 = vsel %vm2106, %v1880, 0.0
        %v2192 = vsel %vm2106, %v1910, 0.0
        %v2193 = vadd.f32 %v2191, %v2192
        %v2194 = vsel %vm2106, %v1940, 0.0
        %v2195 = vadd.f32 %v2193, %v2194
        %v2196 = vsel %vm2106, %v1970, 0.0
        %v2197 = vadd.f32 %v2195, %v2196
        %v2198 = vsel %vm2106, %v1895, 0.0
        %v2199 = vsel %vm2106, %v1925, 0.0
        %v2200 = vadd.f32 %v2198, %v2199
        %v2201 = vsel %vm2106, %v1955, 0.0
        %v2202 = vadd.f32 %v2200, %v2201
        %v2203 = vsel %vm2106, %v1985, 0.0
        %v2204 = vadd.f32 %v2202, %v2203
        %v2205 = vsel %vm2106, %v2000, 0.0
        %v2206 = vsel %vm2106, %v2030, 0.0
        %v2207 = vadd.f32 %v2205, %v2206
        %v2208 = vsel %vm2106, %v2060, 0.0
        %v2209 = vadd.f32 %v2207, %v2208
        %v2210 = vsel %vm2106, %v2090, 0.0
        %v2211 = vadd.f32 %v2209, %v2210
        %v2212 = vsel %vm2106, %v2015, 0.0
        %v2213 = vsel %vm2106, %v2045, 0.0
        %v2214 = vadd.f32 %v2212, %v2213
        %v2215 = vsel %vm2106, %v2075, 0.0
        %v2216 = vadd.f32 %v2214, %v2215
        %v2217 = vsel %vm2106, %v2105, 0.0
        %v2218 = vadd.f32 %v2216, %v2217
        %v2219 = vmul.f32 %v2113, %v810
        %v2220 = vmul.f32 %v2120, %v811
        %v2221 = vmul.f32 %v2127, %v812
        %v2222 = vmul.f32 %v2134, %v813
        %v2223 = vmul.f32 %v2141, %v814
        %v2224 = vmul.f32 %v2148, %v815
        %v2225 = vmul.f32 %v2155, %v816
        %v2226 = vmul.f32 %v2162, %v817
        %v2227 = vmul.f32 %v2169, %v818
        %v2228 = vmul.f32 %v2176, %v819
        %v2229 = vmul.f32 %v2183, %v820
        %v2230 = vmul.f32 %v2190, %v821
        %v2231 = vmul.f32 %v2197, %v822
        %v2232 = vmul.f32 %v2204, %v823
        %v2233 = vmul.f32 %v2211, %v824
        %v2234 = vmul.f32 %v2218, %v825
        %v2235 = vsel %vm2106, %v2219, 0.0
        %v2236 = vsel %vm2106, %v2220, 0.0
        %v2237 = vadd.f32 %v2235, %v2236
        %v2238 = vsel %vm2106, %v2221, 0.0
        %v2239 = vadd.f32 %v2237, %v2238
        %v2240 = vsel %vm2106, %v2222, 0.0
        %v2241 = vadd.f32 %v2239, %v2240
        %v2242 = vsel %vm2106, %v2223, 0.0
        %v2243 = vadd.f32 %v2241, %v2242
        %v2244 = vsel %vm2106, %v2224, 0.0
        %v2245 = vadd.f32 %v2243, %v2244
        %v2246 = vsel %vm2106, %v2225, 0.0
        %v2247 = vadd.f32 %v2245, %v2246
        %v2248 = vsel %vm2106, %v2226, 0.0
        %v2249 = vadd.f32 %v2247, %v2248
        %v2250 = vsel %vm2106, %v2227, 0.0
        %v2251 = vadd.f32 %v2249, %v2250
        %v2252 = vsel %vm2106, %v2228, 0.0
        %v2253 = vadd.f32 %v2251, %v2252
        %v2254 = vsel %vm2106, %v2229, 0.0
        %v2255 = vadd.f32 %v2253, %v2254
        %v2256 = vsel %vm2106, %v2230, 0.0
        %v2257 = vadd.f32 %v2255, %v2256
        %v2258 = vsel %vm2106, %v2231, 0.0
        %v2259 = vadd.f32 %v2257, %v2258
        %v2260 = vsel %vm2106, %v2232, 0.0
        %v2261 = vadd.f32 %v2259, %v2260
        %v2262 = vsel %vm2106, %v2233, 0.0
        %v2263 = vadd.f32 %v2261, %v2262
        %v2264 = vsel %vm2106, %v2234, 0.0
        %v2265 = vadd.f32 %v2263, %v2264
        %2266 = vadd.xlane.f32.xlu0 %v2265
        %v2267 = vpop.xlane.xlu0 %2266
        %v2268 = vrot.slane %v2267, 4
        %v2269 = vadd.f32 %v2267, %v2268
        %v2270 = vrot.slane %v2269, 2
        %v2271 = vadd.f32 %v2269, %v2270
        %v2272 = vrot.slane %v2271, 1
        %v2273 = vadd.f32 %v2271, %v2272
        %s2274 = vtos %v2273
        %s2275 = smul.f32 %s2274, 0.00061035156
        %v2276 = vlaneseq
        %v2277 = vshrl.u32 %v2276, 7
        %v2278 = vlaneseq
        %v2279 = vand.u32 %v2278, 127
        %vm2280 = vcmp.eq.s32.totalorder %v2277, 0
        %vm2281 = vcmp.eq.s32.totalorder %v2279, 0
        %vm2282 = vmand %vm2280, %vm2281
        %v2283 = vstv %s2275
        %v2284 = vsel %vm2282, %v2283, 0.0
        %2285 = vst [vmem:[%s315] sm:$0xff] %v2284
        %p2286 = scmp.eq.s32.totalorder %s26, 0
        // Predicated region
        $region53: #{tpu_custom_call.1} parent=43 // pred_check
          %p2287 = pneg %p2286
        $region54: #{tpu_custom_call.1} parent=43 // pred_check_branch
          %2289 = sbr.rel (%p2287) target = $region56
        $region55: #{tpu_custom_call.1} parent=43 // pred_region
          %v2290 = vld [vmem:[%s0] sm:$0xff]
          %v2291 = vld [vmem:[%s0 + $0x8] sm:$0xff]
          %v2292 = vld [vmem:[%s1] sm:$0xff]
          %v2293 = vld [vmem:[%s1 + $0x8] sm:$0xff]
          %v2294 = vmax.f32 %v2290, 0.0
          %v2295 = vmax.f32 %v2291, 0.0
          %v2296 = vmul.f32 %v2290, %v2292
          %v2297 = vmul.f32 %v2291, %v2293
          %v2298 = vsub.f32 %v2294, %v2296
          %v2299 = vsub.f32 %v2295, %v2297
          %v2300 = vand.u32 2147483647, %v2290
          %v2301 = vand.u32 2147483647, %v2291
          %v2302 = vsub.f32 0.0, %v2300
          %v2303 = vsub.f32 0.0, %v2301
          %v2304 = vmul.f32 %v2302, 1.442695
          %v2305 = vpow.pop %v2304
          %v2306 = vmul.f32 %v2303, 1.442695
          %v2307 = vpow.pop %v2306
          %v2308 = vadd.f32 %v2305, 1.0
          %v2309 = vlog2.pop %v2308
          %v2310 = vmul.f32 %v2309, 0.6931472
          %v2311 = vmul.f32 -0.5, %v2305
          %v2312 = vadd.f32 %v2311, 1.0
          %v2313 = vmul.f32 %v2312, %v2305
          %v2314 = vand.u32 2147483647, %v2305
          %vm2315 = vcmp.lt.f32.partialorder %v2314, 0.0004427343
          %v2316 = vsel %vm2315, %v2313, %v2310
          %v2317 = vadd.f32 %v2307, 1.0
          %v2318 = vlog2.pop %v2317
          %v2319 = vmul.f32 %v2318, 0.6931472
          %v2320 = vmul.f32 -0.5, %v2307
          %v2321 = vadd.f32 %v2320, 1.0
          %v2322 = vmul.f32 %v2321, %v2307
          %v2323 = vand.u32 2147483647, %v2307
          %vm2324 = vcmp.lt.f32.partialorder %v2323, 0.0004427343
          %v2325 = vsel %vm2324, %v2322, %v2319
          %v2326 = vadd.f32 %v2298, %v2316
          %v2327 = vadd.f32 %v2299, %v2325
          %vm2328 = vcmask 31744
          %v2329 = vsel %vm2328, %v2326, 0.0
          %v2330 = vsel %vm2328, %v2327, 0.0
          %v2331 = vadd.f32 %v2329, %v2330
          %2332 = vadd.xlane.f32.xlu0 %v2331
          %v2333 = vpop.xlane.xlu0 %2332
          %v2334 = vrot.slane %v2333, 4
          %v2335 = vadd.f32 %v2333, %v2334
          %v2336 = vrot.slane %v2335, 2
          %v2337 = vadd.f32 %v2335, %v2336
          %v2338 = vrot.slane %v2337, 1
          %v2339 = vadd.f32 %v2337, %v2338
          %s2340 = vtos %v2339
          %s2341 = smul.f32 %s2340, 0.015625
          %v2342 = vld [vmem:[%s315] sm:$0xff]
          %v2343 = vstv %s2341
          %v2344 = vsel %vm2282, %v2343, 0.0
          %v2345 = vadd.f32 %v2342, %v2344
          %2346 = vst [vmem:[%s315] sm:$0xff] %v2345
        $region56: #{tpu_custom_call.1} parent=43 // pred_fallthru
          _
        %s2347 = sand.u32 %s170, 1
        %s2348 = scalar_lea.sflag [#allocation4], %s2347
        %s2349 = sand.u32 %s170, 1
        %s2350 = smul.addr %s2349, 8
        %s2351 = scalar_lea.vmem [#allocation7], %s2350
        // Predicated region
        $region57: #{tpu_custom_call.1} parent=43 // pred_check
          %p2352 = pneg %p180
        $region58: #{tpu_custom_call.1} parent=43 // pred_check_branch
          %2354 = sbr.rel (%p2352) target = $region60
        $region59: #{tpu_custom_call.1} parent=43 // pred_region
          %2356 = vsyncadd %s2348, 0
          %s2357 = smul.addr %s26, 8
          %s2358 = scalar_lea.hbm %s6, %s2357
          %s2360 = sshll.u32 %s2351, 4
          %s2361 = int_to_ptr.vmem [resolvable:$true] %s2360
          %s2362 = sshll.u32 %s2358, 4
          %s2363 = int_to_ptr.hbm [resolvable:$true] %s2362
          %2365 = dma.vmem_to_hbm [thread:$0]  %s2361, 128, %s2363, %s2348
        $region60: #{tpu_custom_call.1} parent=43 // pred_fallthru
          _
      $region44: #{tpu_custom_call.1} parent=5 // pred_fallthru
        _
      %p2366 = scmp.le.s32.totalorder 2, %s21
      // Predicated region
      $region61: #{tpu_custom_call.1} parent=5 // pred_check
        %p2367 = pneg %p2366
      $region62: #{tpu_custom_call.1} parent=5 // pred_check_branch
        %2369 = sbr.rel (%p2367) target = $region64
      $region63: #{tpu_custom_call.1} parent=5 // pred_region
        %s2370 = ssub.s32 %s21, 2
        // Predicated region
        $region65: #{tpu_custom_call.1} parent=63 // pred_check
          %p2371 = pneg %p186
        $region66: #{tpu_custom_call.1} parent=63 // pred_check_branch
          %2373 = sbr.rel (%p2371) target = $region68
        $region67: #{tpu_custom_call.1} parent=63 // pred_region
          %s2374 = sand.u32 %s171, 1
          %s2375 = scalar_lea.sflag [#allocation4], %s2374
          %s2376 = sand.u32 %s171, 1
          %s2377 = smul.addr %s2376, 8
          %s2378 = scalar_lea.vmem [#allocation7], %s2377
          %2380 = dma.done %s2375, 128
        $region68: #{tpu_custom_call.1} parent=63 // pred_fallthru
          _
      $region64: #{tpu_custom_call.1} parent=5 // pred_fallthru
        _
    $region6: #{tpu_custom_call.1} parent=1 // loop_footer
      %s25 = sadd.s32 1, %s21
    $region7: #{tpu_custom_call.1} parent=1 // loop_footer_branch
      %20 = sbr.rel target = $region3
    $region8: #{tpu_custom_call.1} parent=1 // loop_exit
      _
    %2381 = vsyncpa [#allocation3], 1
    %s2382 = scalar_lea.sflag [#allocation3], 1
    %2383 = vsyncpa %s2382, 1
    %2384 = vsyncpa [#allocation6], 1
    %s2385 = scalar_lea.sflag [#allocation6], 1
    %2386 = vsyncpa %s2385, 1
    %2387 = vsyncpa [#allocation4], 1
    %s2388 = scalar_lea.sflag [#allocation4], 1
    %2389 = vsyncpa %s2388, 1

</llo_original>
